<compile_context>
chip_gen: v6e
topology: v6e:2x2x1
jax: 0.10.0
libtpu: 0.0.40
codegen_flags: <defaults>
</compile_context>

<pallas_src>
import functools

import jax
import jax.numpy as jnp
from jax.experimental import pallas as pl
from jax.experimental.pallas import tpu as pltpu


def _motion_predict_kernel(x_ref, wih_ref, whh_ref, wfused_ref, b_ref,
                           bfused_ref, wlin_ref, blin_ref, y_ref,
                           *, input_length, output_length, batch, hidden_dim,
                           input_size):
    H = hidden_dim
    B = batch

    def activate(gates, c_prev):
        i_g = jax.nn.sigmoid(gates[:, 0 * H:1 * H])
        f_g = jax.nn.sigmoid(gates[:, 1 * H:2 * H])
        g_g = jnp.tanh(gates[:, 2 * H:3 * H])
        o_g = jax.nn.sigmoid(gates[:, 3 * H:4 * H])
        c_new = i_g * g_g if c_prev is None else f_g * c_prev + i_g * g_g
        h_new = o_g * jnp.tanh(c_new)
        return h_new, c_new

    # ---- Encoder -----------------------------------------------------------
    # Input projections for every timestep in one batched MXU call; only the
    # h @ W_hh term stays on the serial critical path.  Bias folded in once.
    bias_b = jnp.broadcast_to(b_ref[...], (input_length * B, 4 * H))
    pre_gates = (jnp.dot(x_ref[...], wih_ref[...],
                         preferred_element_type=jnp.float32) + bias_b)

    whh = whh_ref[...]
    h = None
    c = None
    for t in range(input_length):                 # static trip count: unrolled
        pg = pre_gates[t * B:(t + 1) * B, :]
        if t == 0:
            gates = pg                            # h0 = c0 = 0
        else:
            gates = pg + jnp.dot(h, whh, preferred_element_type=jnp.float32)
        h, c = activate(gates, c)

    # ---- Decoder -----------------------------------------------------------
    # Linear -> LSTM input projection fused: one matmul per serial step.
    wfused = wfused_ref[...]
    bfused_b = jnp.broadcast_to(bfused_ref[...], (B, 4 * H))
    hs = []
    for t in range(output_length):                # static trip count: unrolled
        hs.append(h)
        if t < output_length - 1:                 # last recurrence never used
            gates = (jnp.dot(h, wfused, preferred_element_type=jnp.float32)
                     + bfused_b)
            h, c = activate(gates, c)

    # y_t = h_t @ W_lin^T + b_lin for all t: one batched matmul, one store.
    h_stack = jnp.concatenate(hs, axis=0)                          # (O*B, H)
    blin_b = jnp.broadcast_to(blin_ref[...], (output_length * B, input_size))
    y_ref[...] = (jnp.dot(h_stack, wlin_ref[...],
                          preferred_element_type=jnp.float32) + blin_b)


def motion_predict(x, params, *, hidden_dim, output_length):
    """x: (input_length, batch, input_size) float32."""
    input_length, batch, input_size = x.shape
    wih_t, whh_t, bias, wlin_t, blin = params     # pre-transposed weights

    # Algebraic fusion of the decoder's Linear -> LSTM input projection
    # (computed once in f32 in the wrapper, outside the kernel).
    wfused = whh_t + wlin_t @ wih_t               # (H, 4H)
    bfused = bias + blin @ wih_t                  # (1, 4H)

    # Seq-major input flattened to 2D so the encoder projection is one matmul.
    x2d = x.reshape(input_length * batch, input_size)

    kernel = functools.partial(
        _motion_predict_kernel,
        input_length=input_length,
        output_length=output_length,
        batch=batch,
        hidden_dim=hidden_dim,
        input_size=input_size,
    )

    vmem = pl.BlockSpec(memory_space=pltpu.MemorySpace.VMEM)
    y2d = pl.pallas_call(
        kernel,
        out_shape=jax.ShapeDtypeStruct((output_length * batch, input_size),
                                       jnp.float32),
        in_specs=[vmem] * 8,
        out_specs=vmem,
    )(x2d, wih_t, whh_t, wfused, bias, bfused, wlin_t, blin)
    return y2d.reshape(output_length, batch, input_size)


def _reference(x, params, *, hidden_dim, output_length):
    """Pure-JAX reference mirroring the PyTorch forward."""
    wih_t, whh_t, bias, wlin_t, blin = params
    H = hidden_dim
    input_length, batch, _ = x.shape
    h = jnp.zeros((batch, H), jnp.float32)
    c = jnp.zeros((batch, H), jnp.float32)

    def step(x_t, h, c):
        gates = x_t @ wih_t + h @ whh_t + bias
        i = jax.nn.sigmoid(gates[:, 0 * H:1 * H])
        f = jax.nn.sigmoid(gates[:, 1 * H:2 * H])
        g = jnp.tanh(gates[:, 2 * H:3 * H])
        o = jax.nn.sigmoid(gates[:, 3 * H:4 * H])
        c = f * c + i * g
        h = o * jnp.tanh(c)
        return h, c

    for t in range(input_length):
        h, c = step(x[t], h, c)
    ys = []
    for _ in range(output_length):
        out = h @ wlin_t + blin
        ys.append(out)
        h, c = step(out, h, c)
    return jnp.stack(ys, axis=0)


def init_params(key, input_size, hidden_dim):
    """Deterministic init, matching PyTorch shapes (weights pre-transposed)."""
    k = 1.0 / jnp.sqrt(hidden_dim)
    keys = jax.random.split(key, 6)
    # LSTMCell: weight_ih (4H, in), weight_hh (4H, H), bias_ih/bias_hh (4H,)
    w_ih = jax.random.uniform(keys[0], (4 * hidden_dim, input_size), jnp.float32, -k, k)
    w_hh = jax.random.uniform(keys[1], (4 * hidden_dim, hidden_dim), jnp.float32, -k, k)
    b_ih = jax.random.uniform(keys[2], (4 * hidden_dim,), jnp.float32, -k, k)
    b_hh = jax.random.uniform(keys[3], (4 * hidden_dim,), jnp.float32, -k, k)
    # Linear: weight (in, H), bias (in,)
    w_lin = jax.random.uniform(keys[4], (input_size, hidden_dim), jnp.float32, -k, k)
    b_lin = jax.random.uniform(keys[5], (input_size,), jnp.float32, -k, k)

    wih_t = w_ih.T                      # (in, 4H)
    whh_t = w_hh.T                      # (H, 4H)
    bias = (b_ih + b_hh)[None, :]       # (1, 4H)
    wlin_t = w_lin.T                    # (H, in)
    blin = b_lin[None, :]               # (1, in)
    return wih_t, whh_t, bias, wlin_t, blin


if __name__ == "__main__":
    # Small shapes consistent with the module's forward.
    input_size = 16
    hidden_dim = 32
    input_length = 8
    output_length = 4
    batch = 8

    key = jax.random.PRNGKey(0)
    kx, kp = jax.random.split(key)
    x = jax.random.normal(kx, (input_length, batch, input_size), jnp.float32)
    params = init_params(kp, input_size, hidden_dim)

    y = motion_predict(x, params, hidden_dim=hidden_dim,
                       output_length=output_length)
    y = jax.block_until_ready(y)

    y_ref = _reference(x, params, hidden_dim=hidden_dim,
                       output_length=output_length)
    assert y.shape == (output_length, batch, input_size)
    # Decoder weight fusion reorders f32 sums -> slightly looser tolerance.
    assert jnp.allclose(y, y_ref, atol=1e-4, rtol=1e-4)

    print("KERNEL_OK")
</pallas_src>

<mosaic_0001>
module attributes {stable_mosaic.version = 11 : i64} {
  func.func @_motion_predict_kernel(%arg0: memref<64x16xf32, #tpu.memory_space<vmem>>, %arg1: memref<16x128xf32, #tpu.memory_space<vmem>>, %arg2: memref<32x128xf32, #tpu.memory_space<vmem>>, %arg3: memref<32x128xf32, #tpu.memory_space<vmem>>, %arg4: memref<1x128xf32, #tpu.memory_space<vmem>>, %arg5: memref<1x128xf32, #tpu.memory_space<vmem>>, %arg6: memref<32x16xf32, #tpu.memory_space<vmem>>, %arg7: memref<1x16xf32, #tpu.memory_space<vmem>>, %arg8: memref<32x16xf32, #tpu.memory_space<vmem>>) attributes {dimension_semantics = [], scalar_prefetch = 0 : i64, scratch_operands = 0 : i64, tpu.core_type = #tpu.core_type<tc>} {
    %c0 = arith.constant 0 : index
    %c0_0 = arith.constant 0 : index
    %0 = vector.load %arg4[%c0, %c0_0] : memref<1x128xf32, #tpu.memory_space<vmem>>, vector<1x128xf32>
    %1 = vector.shape_cast %0 : vector<1x128xf32> to vector<1x128xf32>
    %2 = vector.broadcast %1 : vector<1x128xf32> to vector<64x128xf32>
    %c0_1 = arith.constant 0 : index
    %c0_2 = arith.constant 0 : index
    %3 = vector.load %arg0[%c0_1, %c0_2] : memref<64x16xf32, #tpu.memory_space<vmem>>, vector<64x16xf32>
    %c0_3 = arith.constant 0 : index
    %c0_4 = arith.constant 0 : index
    %4 = vector.load %arg1[%c0_3, %c0_4] : memref<16x128xf32, #tpu.memory_space<vmem>>, vector<16x128xf32>
    %cst = arith.constant dense<0.000000e+00> : vector<64x128xf32>
    %5 = tpu.matmul %3, %4, %cst {dimension_numbers = #tpu.dot_dimension_numbers<[1], [0], [0], [1], [0, 0, 1, 1], [], []>} : vector<64x16xf32>, vector<16x128xf32>, vector<64x128xf32> -> vector<64x128xf32>
    %6 = arith.addf %5, %2 : vector<64x128xf32>
    %c0_5 = arith.constant 0 : index
    %c0_6 = arith.constant 0 : index
    %7 = vector.load %arg2[%c0_5, %c0_6] : memref<32x128xf32, #tpu.memory_space<vmem>>, vector<32x128xf32>
    %8 = vector.extract_strided_slice %6 {offsets = [0, 0], sizes = [8, 128], strides = [1, 1]} : vector<64x128xf32> to vector<8x128xf32>
    %9 = vector.extract_strided_slice %8 {offsets = [0, 0], sizes = [8, 32], strides = [1, 1]} : vector<8x128xf32> to vector<8x32xf32>
    %10 = arith.negf %9 : vector<8x32xf32>
    %11 = math.exp %10 : vector<8x32xf32>
    %cst_7 = arith.constant 1.000000e+00 : f32
    %12 = vector.broadcast %cst_7 : f32 to vector<8x32xf32>
    %13 = arith.addf %12, %11 : vector<8x32xf32>
    %14 = arith.divf %12, %13 : vector<8x32xf32>
    %15 = vector.extract_strided_slice %8 {offsets = [0, 64], sizes = [8, 32], strides = [1, 1]} : vector<8x128xf32> to vector<8x32xf32>
    %16 = math.tanh %15 : vector<8x32xf32>
    %17 = vector.extract_strided_slice %8 {offsets = [0, 96], sizes = [8, 32], strides = [1, 1]} : vector<8x128xf32> to vector<8x32xf32>
    %18 = arith.negf %17 : vector<8x32xf32>
    %19 = math.exp %18 : vector<8x32xf32>
    %cst_8 = arith.constant 1.000000e+00 : f32
    %20 = vector.broadcast %cst_8 : f32 to vector<8x32xf32>
    %21 = arith.addf %20, %19 : vector<8x32xf32>
    %22 = arith.divf %20, %21 : vector<8x32xf32>
    %23 = arith.mulf %14, %16 : vector<8x32xf32>
    %24 = math.tanh %23 : vector<8x32xf32>
    %25 = arith.mulf %22, %24 : vector<8x32xf32>
    %26 = vector.extract_strided_slice %6 {offsets = [8, 0], sizes = [8, 128], strides = [1, 1]} : vector<64x128xf32> to vector<8x128xf32>
    %cst_9 = arith.constant dense<0.000000e+00> : vector<8x128xf32>
    %27 = tpu.matmul %25, %7, %cst_9 {dimension_numbers = #tpu.dot_dimension_numbers<[1], [0], [0], [1], [0, 0, 1, 1], [], []>} : vector<8x32xf32>, vector<32x128xf32>, vector<8x128xf32> -> vector<8x128xf32>
    %28 = arith.addf %26, %27 : vector<8x128xf32>
    %29 = vector.extract_strided_slice %28 {offsets = [0, 0], sizes = [8, 32], strides = [1, 1]} : vector<8x128xf32> to vector<8x32xf32>
    %30 = arith.negf %29 : vector<8x32xf32>
    %31 = math.exp %30 : vector<8x32xf32>
    %cst_10 = arith.constant 1.000000e+00 : f32
    %32 = vector.broadcast %cst_10 : f32 to vector<8x32xf32>
    %33 = arith.addf %32, %31 : vector<8x32xf32>
    %34 = arith.divf %32, %33 : vector<8x32xf32>
    %35 = vector.extract_strided_slice %28 {offsets = [0, 32], sizes = [8, 32], strides = [1, 1]} : vector<8x128xf32> to vector<8x32xf32>
    %36 = arith.negf %35 : vector<8x32xf32>
    %37 = math.exp %36 : vector<8x32xf32>
    %cst_11 = arith.constant 1.000000e+00 : f32
    %38 = vector.broadcast %cst_11 : f32 to vector<8x32xf32>
    %39 = arith.addf %38, %37 : vector<8x32xf32>
    %40 = arith.divf %38, %39 : vector<8x32xf32>
    %41 = vector.extract_strided_slice %28 {offsets = [0, 64], sizes = [8, 32], strides = [1, 1]} : vector<8x128xf32> to vector<8x32xf32>
    %42 = math.tanh %41 : vector<8x32xf32>
    %43 = vector.extract_strided_slice %28 {offsets = [0, 96], sizes = [8, 32], strides = [1, 1]} : vector<8x128xf32> to vector<8x32xf32>
    %44 = arith.negf %43 : vector<8x32xf32>
    %45 = math.exp %44 : vector<8x32xf32>
    %cst_12 = arith.constant 1.000000e+00 : f32
    %46 = vector.broadcast %cst_12 : f32 to vector<8x32xf32>
    %47 = arith.addf %46, %45 : vector<8x32xf32>
    %48 = arith.divf %46, %47 : vector<8x32xf32>
    %49 = arith.mulf %40, %23 : vector<8x32xf32>
    %50 = arith.mulf %34, %42 : vector<8x32xf32>
    %51 = arith.addf %49, %50 : vector<8x32xf32>
    %52 = math.tanh %51 : vector<8x32xf32>
    %53 = arith.mulf %48, %52 : vector<8x32xf32>
    %54 = vector.extract_strided_slice %6 {offsets = [16, 0], sizes = [8, 128], strides = [1, 1]} : vector<64x128xf32> to vector<8x128xf32>
    %cst_13 = arith.constant dense<0.000000e+00> : vector<8x128xf32>
    %55 = tpu.matmul %53, %7, %cst_13 {dimension_numbers = #tpu.dot_dimension_numbers<[1], [0], [0], [1], [0, 0, 1, 1], [], []>} : vector<8x32xf32>, vector<32x128xf32>, vector<8x128xf32> -> vector<8x128xf32>
    %56 = arith.addf %54, %55 : vector<8x128xf32>
    %57 = vector.extract_strided_slice %56 {offsets = [0, 0], sizes = [8, 32], strides = [1, 1]} : vector<8x128xf32> to vector<8x32xf32>
    %58 = arith.negf %57 : vector<8x32xf32>
    %59 = math.exp %58 : vector<8x32xf32>
    %cst_14 = arith.constant 1.000000e+00 : f32
    %60 = vector.broadcast %cst_14 : f32 to vector<8x32xf32>
    %61 = arith.addf %60, %59 : vector<8x32xf32>
    %62 = arith.divf %60, %61 : vector<8x32xf32>
    %63 = vector.extract_strided_slice %56 {offsets = [0, 32], sizes = [8, 32], strides = [1, 1]} : vector<8x128xf32> to vector<8x32xf32>
    %64 = arith.negf %63 : vector<8x32xf32>
    %65 = math.exp %64 : vector<8x32xf32>
    %cst_15 = arith.constant 1.000000e+00 : f32
    %66 = vector.broadcast %cst_15 : f32 to vector<8x32xf32>
    %67 = arith.addf %66, %65 : vector<8x32xf32>
    %68 = arith.divf %66, %67 : vector<8x32xf32>
    %69 = vector.extract_strided_slice %56 {offsets = [0, 64], sizes = [8, 32], strides = [1, 1]} : vector<8x128xf32> to vector<8x32xf32>
    %70 = math.tanh %69 : vector<8x32xf32>
    %71 = vector.extract_strided_slice %56 {offsets = [0, 96], sizes = [8, 32], strides = [1, 1]} : vector<8x128xf32> to vector<8x32xf32>
    %72 = arith.negf %71 : vector<8x32xf32>
    %73 = math.exp %72 : vector<8x32xf32>
    %cst_16 = arith.constant 1.000000e+00 : f32
    %74 = vector.broadcast %cst_16 : f32 to vector<8x32xf32>
    %75 = arith.addf %74, %73 : vector<8x32xf32>
    %76 = arith.divf %74, %75 : vector<8x32xf32>
    %77 = arith.mulf %68, %51 : vector<8x32xf32>
    %78 = arith.mulf %62, %70 : vector<8x32xf32>
    %79 = arith.addf %77, %78 : vector<8x32xf32>
    %80 = math.tanh %79 : vector<8x32xf32>
    %81 = arith.mulf %76, %80 : vector<8x32xf32>
    %82 = vector.extract_strided_slice %6 {offsets = [24, 0], sizes = [8, 128], strides = [1, 1]} : vector<64x128xf32> to vector<8x128xf32>
    %cst_17 = arith.constant dense<0.000000e+00> : vector<8x128xf32>
    %83 = tpu.matmul %81, %7, %cst_17 {dimension_numbers = #tpu.dot_dimension_numbers<[1], [0], [0], [1], [0, 0, 1, 1], [], []>} : vector<8x32xf32>, vector<32x128xf32>, vector<8x128xf32> -> vector<8x128xf32>
    %84 = arith.addf %82, %83 : vector<8x128xf32>
    %85 = vector.extract_strided_slice %84 {offsets = [0, 0], sizes = [8, 32], strides = [1, 1]} : vector<8x128xf32> to vector<8x32xf32>
    %86 = arith.negf %85 : vector<8x32xf32>
    %87 = math.exp %86 : vector<8x32xf32>
    %cst_18 = arith.constant 1.000000e+00 : f32
    %88 = vector.broadcast %cst_18 : f32 to vector<8x32xf32>
    %89 = arith.addf %88, %87 : vector<8x32xf32>
    %90 = arith.divf %88, %89 : vector<8x32xf32>
    %91 = vector.extract_strided_slice %84 {offsets = [0, 32], sizes = [8, 32], strides = [1, 1]} : vector<8x128xf32> to vector<8x32xf32>
    %92 = arith.negf %91 : vector<8x32xf32>
    %93 = math.exp %92 : vector<8x32xf32>
    %cst_19 = arith.constant 1.000000e+00 : f32
    %94 = vector.broadcast %cst_19 : f32 to vector<8x32xf32>
    %95 = arith.addf %94, %93 : vector<8x32xf32>
    %96 = arith.divf %94, %95 : vector<8x32xf32>
    %97 = vector.extract_strided_slice %84 {offsets = [0, 64], sizes = [8, 32], strides = [1, 1]} : vector<8x128xf32> to vector<8x32xf32>
    %98 = math.tanh %97 : vector<8x32xf32>
    %99 = vector.extract_strided_slice %84 {offsets = [0, 96], sizes = [8, 32], strides = [1, 1]} : vector<8x128xf32> to vector<8x32xf32>
    %100 = arith.negf %99 : vector<8x32xf32>
    %101 = math.exp %100 : vector<8x32xf32>
    %cst_20 = arith.constant 1.000000e+00 : f32
    %102 = vector.broadcast %cst_20 : f32 to vector<8x32xf32>
    %103 = arith.addf %102, %101 : vector<8x32xf32>
    %104 = arith.divf %102, %103 : vector<8x32xf32>
    %105 = arith.mulf %96, %79 : vector<8x32xf32>
    %106 = arith.mulf %90, %98 : vector<8x32xf32>
    %107 = arith.addf %105, %106 : vector<8x32xf32>
    %108 = math.tanh %107 : vector<8x32xf32>
    %109 = arith.mulf %104, %108 : vector<8x32xf32>
    %110 = vector.extract_strided_slice %6 {offsets = [32, 0], sizes = [8, 128], strides = [1, 1]} : vector<64x128xf32> to vector<8x128xf32>
    %cst_21 = arith.constant dense<0.000000e+00> : vector<8x128xf32>
    %111 = tpu.matmul %109, %7, %cst_21 {dimension_numbers = #tpu.dot_dimension_numbers<[1], [0], [0], [1], [0, 0, 1, 1], [], []>} : vector<8x32xf32>, vector<32x128xf32>, vector<8x128xf32> -> vector<8x128xf32>
    %112 = arith.addf %110, %111 : vector<8x128xf32>
    %113 = vector.extract_strided_slice %112 {offsets = [0, 0], sizes = [8, 32], strides = [1, 1]} : vector<8x128xf32> to vector<8x32xf32>
    %114 = arith.negf %113 : vector<8x32xf32>
    %115 = math.exp %114 : vector<8x32xf32>
    %cst_22 = arith.constant 1.000000e+00 : f32
    %116 = vector.broadcast %cst_22 : f32 to vector<8x32xf32>
    %117 = arith.addf %116, %115 : vector<8x32xf32>
    %118 = arith.divf %116, %117 : vector<8x32xf32>
    %119 = vector.extract_strided_slice %112 {offsets = [0, 32], sizes = [8, 32], strides = [1, 1]} : vector<8x128xf32> to vector<8x32xf32>
    %120 = arith.negf %119 : vector<8x32xf32>
    %121 = math.exp %120 : vector<8x32xf32>
    %cst_23 = arith.constant 1.000000e+00 : f32
    %122 = vector.broadcast %cst_23 : f32 to vector<8x32xf32>
    %123 = arith.addf %122, %121 : vector<8x32xf32>
    %124 = arith.divf %122, %123 : vector<8x32xf32>
    %125 = vector.extract_strided_slice %112 {offsets = [0, 64], sizes = [8, 32], strides = [1, 1]} : vector<8x128xf32> to vector<8x32xf32>
    %126 = math.tanh %125 : vector<8x32xf32>
    %127 = vector.extract_strided_slice %112 {offsets = [0, 96], sizes = [8, 32], strides = [1, 1]} : vector<8x128xf32> to vector<8x32xf32>
    %128 = arith.negf %127 : vector<8x32xf32>
    %129 = math.exp %128 : vector<8x32xf32>
    %cst_24 = arith.constant 1.000000e+00 : f32
    %130 = vector.broadcast %cst_24 : f32 to vector<8x32xf32>
    %131 = arith.addf %130, %129 : vector<8x32xf32>
    %132 = arith.divf %130, %131 : vector<8x32xf32>
    %133 = arith.mulf %124, %107 : vector<8x32xf32>
    %134 = arith.mulf %118, %126 : vector<8x32xf32>
    %135 = arith.addf %133, %134 : vector<8x32xf32>
    %136 = math.tanh %135 : vector<8x32xf32>
    %137 = arith.mulf %132, %136 : vector<8x32xf32>
    %138 = vector.extract_strided_slice %6 {offsets = [40, 0], sizes = [8, 128], strides = [1, 1]} : vector<64x128xf32> to vector<8x128xf32>
    %cst_25 = arith.constant dense<0.000000e+00> : vector<8x128xf32>
    %139 = tpu.matmul %137, %7, %cst_25 {dimension_numbers = #tpu.dot_dimension_numbers<[1], [0], [0], [1], [0, 0, 1, 1], [], []>} : vector<8x32xf32>, vector<32x128xf32>, vector<8x128xf32> -> vector<8x128xf32>
    %140 = arith.addf %138, %139 : vector<8x128xf32>
    %141 = vector.extract_strided_slice %140 {offsets = [0, 0], sizes = [8, 32], strides = [1, 1]} : vector<8x128xf32> to vector<8x32xf32>
    %142 = arith.negf %141 : vector<8x32xf32>
    %143 = math.exp %142 : vector<8x32xf32>
    %cst_26 = arith.constant 1.000000e+00 : f32
    %144 = vector.broadcast %cst_26 : f32 to vector<8x32xf32>
    %145 = arith.addf %144, %143 : vector<8x32xf32>
    %146 = arith.divf %144, %145 : vector<8x32xf32>
    %147 = vector.extract_strided_slice %140 {offsets = [0, 32], sizes = [8, 32], strides = [1, 1]} : vector<8x128xf32> to vector<8x32xf32>
    %148 = arith.negf %147 : vector<8x32xf32>
    %149 = math.exp %148 : vector<8x32xf32>
    %cst_27 = arith.constant 1.000000e+00 : f32
    %150 = vector.broadcast %cst_27 : f32 to vector<8x32xf32>
    %151 = arith.addf %150, %149 : vector<8x32xf32>
    %152 = arith.divf %150, %151 : vector<8x32xf32>
    %153 = vector.extract_strided_slice %140 {offsets = [0, 64], sizes = [8, 32], strides = [1, 1]} : vector<8x128xf32> to vector<8x32xf32>
    %154 = math.tanh %153 : vector<8x32xf32>
    %155 = vector.extract_strided_slice %140 {offsets = [0, 96], sizes = [8, 32], strides = [1, 1]} : vector<8x128xf32> to vector<8x32xf32>
    %156 = arith.negf %155 : vector<8x32xf32>
    %157 = math.exp %156 : vector<8x32xf32>
    %cst_28 = arith.constant 1.000000e+00 : f32
    %158 = vector.broadcast %cst_28 : f32 to vector<8x32xf32>
    %159 = arith.addf %158, %157 : vector<8x32xf32>
    %160 = arith.divf %158, %159 : vector<8x32xf32>
    %161 = arith.mulf %152, %135 : vector<8x32xf32>
    %162 = arith.mulf %146, %154 : vector<8x32xf32>
    %163 = arith.addf %161, %162 : vector<8x32xf32>
    %164 = math.tanh %163 : vector<8x32xf32>
    %165 = arith.mulf %160, %164 : vector<8x32xf32>
    %166 = vector.extract_strided_slice %6 {offsets = [48, 0], sizes = [8, 128], strides = [1, 1]} : vector<64x128xf32> to vector<8x128xf32>
    %cst_29 = arith.constant dense<0.000000e+00> : vector<8x128xf32>
    %167 = tpu.matmul %165, %7, %cst_29 {dimension_numbers = #tpu.dot_dimension_numbers<[1], [0], [0], [1], [0, 0, 1, 1], [], []>} : vector<8x32xf32>, vector<32x128xf32>, vector<8x128xf32> -> vector<8x128xf32>
    %168 = arith.addf %166, %167 : vector<8x128xf32>
    %169 = vector.extract_strided_slice %168 {offsets = [0, 0], sizes = [8, 32], strides = [1, 1]} : vector<8x128xf32> to vector<8x32xf32>
    %170 = arith.negf %169 : vector<8x32xf32>
    %171 = math.exp %170 : vector<8x32xf32>
    %cst_30 = arith.constant 1.000000e+00 : f32
    %172 = vector.broadcast %cst_30 : f32 to vector<8x32xf32>
    %173 = arith.addf %172, %171 : vector<8x32xf32>
    %174 = arith.divf %172, %173 : vector<8x32xf32>
    %175 = vector.extract_strided_slice %168 {offsets = [0, 32], sizes = [8, 32], strides = [1, 1]} : vector<8x128xf32> to vector<8x32xf32>
    %176 = arith.negf %175 : vector<8x32xf32>
    %177 = math.exp %176 : vector<8x32xf32>
    %cst_31 = arith.constant 1.000000e+00 : f32
    %178 = vector.broadcast %cst_31 : f32 to vector<8x32xf32>
    %179 = arith.addf %178, %177 : vector<8x32xf32>
    %180 = arith.divf %178, %179 : vector<8x32xf32>
    %181 = vector.extract_strided_slice %168 {offsets = [0, 64], sizes = [8, 32], strides = [1, 1]} : vector<8x128xf32> to vector<8x32xf32>
    %182 = math.tanh %181 : vector<8x32xf32>
    %183 = vector.extract_strided_slice %168 {offsets = [0, 96], sizes = [8, 32], strides = [1, 1]} : vector<8x128xf32> to vector<8x32xf32>
    %184 = arith.negf %183 : vector<8x32xf32>
    %185 = math.exp %184 : vector<8x32xf32>
    %cst_32 = arith.constant 1.000000e+00 : f32
    %186 = vector.broadcast %cst_32 : f32 to vector<8x32xf32>
    %187 = arith.addf %186, %185 : vector<8x32xf32>
    %188 = arith.divf %186, %187 : vector<8x32xf32>
    %189 = arith.mulf %180, %163 : vector<8x32xf32>
    %190 = arith.mulf %174, %182 : vector<8x32xf32>
    %191 = arith.addf %189, %190 : vector<8x32xf32>
    %192 = math.tanh %191 : vector<8x32xf32>
    %193 = arith.mulf %188, %192 : vector<8x32xf32>
    %194 = vector.extract_strided_slice %6 {offsets = [56, 0], sizes = [8, 128], strides = [1, 1]} : vector<64x128xf32> to vector<8x128xf32>
    %cst_33 = arith.constant dense<0.000000e+00> : vector<8x128xf32>
    %195 = tpu.matmul %193, %7, %cst_33 {dimension_numbers = #tpu.dot_dimension_numbers<[1], [0], [0], [1], [0, 0, 1, 1], [], []>} : vector<8x32xf32>, vector<32x128xf32>, vector<8x128xf32> -> vector<8x128xf32>
    %196 = arith.addf %194, %195 : vector<8x128xf32>
    %197 = vector.extract_strided_slice %196 {offsets = [0, 0], sizes = [8, 32], strides = [1, 1]} : vector<8x128xf32> to vector<8x32xf32>
    %198 = arith.negf %197 : vector<8x32xf32>
    %199 = math.exp %198 : vector<8x32xf32>
    %cst_34 = arith.constant 1.000000e+00 : f32
    %200 = vector.broadcast %cst_34 : f32 to vector<8x32xf32>
    %201 = arith.addf %200, %199 : vector<8x32xf32>
    %202 = arith.divf %200, %201 : vector<8x32xf32>
    %203 = vector.extract_strided_slice %196 {offsets = [0, 32], sizes = [8, 32], strides = [1, 1]} : vector<8x128xf32> to vector<8x32xf32>
    %204 = arith.negf %203 : vector<8x32xf32>
    %205 = math.exp %204 : vector<8x32xf32>
    %cst_35 = arith.constant 1.000000e+00 : f32
    %206 = vector.broadcast %cst_35 : f32 to vector<8x32xf32>
    %207 = arith.addf %206, %205 : vector<8x32xf32>
    %208 = arith.divf %206, %207 : vector<8x32xf32>
    %209 = vector.extract_strided_slice %196 {offsets = [0, 64], sizes = [8, 32], strides = [1, 1]} : vector<8x128xf32> to vector<8x32xf32>
    %210 = math.tanh %209 : vector<8x32xf32>
    %211 = vector.extract_strided_slice %196 {offsets = [0, 96], sizes = [8, 32], strides = [1, 1]} : vector<8x128xf32> to vector<8x32xf32>
    %212 = arith.negf %211 : vector<8x32xf32>
    %213 = math.exp %212 : vector<8x32xf32>
    %cst_36 = arith.constant 1.000000e+00 : f32
    %214 = vector.broadcast %cst_36 : f32 to vector<8x32xf32>
    %215 = arith.addf %214, %213 : vector<8x32xf32>
    %216 = arith.divf %214, %215 : vector<8x32xf32>
    %217 = arith.mulf %208, %191 : vector<8x32xf32>
    %218 = arith.mulf %202, %210 : vector<8x32xf32>
    %219 = arith.addf %217, %218 : vector<8x32xf32>
    %220 = math.tanh %219 : vector<8x32xf32>
    %221 = arith.mulf %216, %220 : vector<8x32xf32>
    %c0_37 = arith.constant 0 : index
    %c0_38 = arith.constant 0 : index
    %222 = vector.load %arg3[%c0_37, %c0_38] : memref<32x128xf32, #tpu.memory_space<vmem>>, vector<32x128xf32>
    %c0_39 = arith.constant 0 : index
    %c0_40 = arith.constant 0 : index
    %223 = vector.load %arg5[%c0_39, %c0_40] : memref<1x128xf32, #tpu.memory_space<vmem>>, vector<1x128xf32>
    %224 = vector.shape_cast %223 : vector<1x128xf32> to vector<1x128xf32>
    %225 = vector.broadcast %224 : vector<1x128xf32> to vector<8x128xf32>
    %cst_41 = arith.constant dense<0.000000e+00> : vector<8x128xf32>
    %226 = tpu.matmul %221, %222, %cst_41 {dimension_numbers = #tpu.dot_dimension_numbers<[1], [0], [0], [1], [0, 0, 1, 1], [], []>} : vector<8x32xf32>, vector<32x128xf32>, vector<8x128xf32> -> vector<8x128xf32>
    %227 = arith.addf %226, %225 : vector<8x128xf32>
    %228 = vector.extract_strided_slice %227 {offsets = [0, 0], sizes = [8, 32], strides = [1, 1]} : vector<8x128xf32> to vector<8x32xf32>
    %229 = arith.negf %228 : vector<8x32xf32>
    %230 = math.exp %229 : vector<8x32xf32>
    %cst_42 = arith.constant 1.000000e+00 : f32
    %231 = vector.broadcast %cst_42 : f32 to vector<8x32xf32>
    %232 = arith.addf %231, %230 : vector<8x32xf32>
    %233 = arith.divf %231, %232 : vector<8x32xf32>
    %234 = vector.extract_strided_slice %227 {offsets = [0, 32], sizes = [8, 32], strides = [1, 1]} : vector<8x128xf32> to vector<8x32xf32>
    %235 = arith.negf %234 : vector<8x32xf32>
    %236 = math.exp %235 : vector<8x32xf32>
    %cst_43 = arith.constant 1.000000e+00 : f32
    %237 = vector.broadcast %cst_43 : f32 to vector<8x32xf32>
    %238 = arith.addf %237, %236 : vector<8x32xf32>
    %239 = arith.divf %237, %238 : vector<8x32xf32>
    %240 = vector.extract_strided_slice %227 {offsets = [0, 64], sizes = [8, 32], strides = [1, 1]} : vector<8x128xf32> to vector<8x32xf32>
    %241 = math.tanh %240 : vector<8x32xf32>
    %242 = vector.extract_strided_slice %227 {offsets = [0, 96], sizes = [8, 32], strides = [1, 1]} : vector<8x128xf32> to vector<8x32xf32>
    %243 = arith.negf %242 : vector<8x32xf32>
    %244 = math.exp %243 : vector<8x32xf32>
    %cst_44 = arith.constant 1.000000e+00 : f32
    %245 = vector.broadcast %cst_44 : f32 to vector<8x32xf32>
    %246 = arith.addf %245, %244 : vector<8x32xf32>
    %247 = arith.divf %245, %246 : vector<8x32xf32>
    %248 = arith.mulf %239, %219 : vector<8x32xf32>
    %249 = arith.mulf %233, %241 : vector<8x32xf32>
    %250 = arith.addf %248, %249 : vector<8x32xf32>
    %251 = math.tanh %250 : vector<8x32xf32>
    %252 = arith.mulf %247, %251 : vector<8x32xf32>
    %cst_45 = arith.constant dense<0.000000e+00> : vector<8x128xf32>
    %253 = tpu.matmul %252, %222, %cst_45 {dimension_numbers = #tpu.dot_dimension_numbers<[1], [0], [0], [1], [0, 0, 1, 1], [], []>} : vector<8x32xf32>, vector<32x128xf32>, vector<8x128xf32> -> vector<8x128xf32>
    %254 = arith.addf %253, %225 : vector<8x128xf32>
    %255 = vector.extract_strided_slice %254 {offsets = [0, 0], sizes = [8, 32], strides = [1, 1]} : vector<8x128xf32> to vector<8x32xf32>
    %256 = arith.negf %255 : vector<8x32xf32>
    %257 = math.exp %256 : vector<8x32xf32>
    %cst_46 = arith.constant 1.000000e+00 : f32
    %258 = vector.broadcast %cst_46 : f32 to vector<8x32xf32>
    %259 = arith.addf %258, %257 : vector<8x32xf32>
    %260 = arith.divf %258, %259 : vector<8x32xf32>
    %261 = vector.extract_strided_slice %254 {offsets = [0, 32], sizes = [8, 32], strides = [1, 1]} : vector<8x128xf32> to vector<8x32xf32>
    %262 = arith.negf %261 : vector<8x32xf32>
    %263 = math.exp %262 : vector<8x32xf32>
    %cst_47 = arith.constant 1.000000e+00 : f32
    %264 = vector.broadcast %cst_47 : f32 to vector<8x32xf32>
    %265 = arith.addf %264, %263 : vector<8x32xf32>
    %266 = arith.divf %264, %265 : vector<8x32xf32>
    %267 = vector.extract_strided_slice %254 {offsets = [0, 64], sizes = [8, 32], strides = [1, 1]} : vector<8x128xf32> to vector<8x32xf32>
    %268 = math.tanh %267 : vector<8x32xf32>
    %269 = vector.extract_strided_slice %254 {offsets = [0, 96], sizes = [8, 32], strides = [1, 1]} : vector<8x128xf32> to vector<8x32xf32>
    %270 = arith.negf %269 : vector<8x32xf32>
    %271 = math.exp %270 : vector<8x32xf32>
    %cst_48 = arith.constant 1.000000e+00 : f32
    %272 = vector.broadcast %cst_48 : f32 to vector<8x32xf32>
    %273 = arith.addf %272, %271 : vector<8x32xf32>
    %274 = arith.divf %272, %273 : vector<8x32xf32>
    %275 = arith.mulf %266, %250 : vector<8x32xf32>
    %276 = arith.mulf %260, %268 : vector<8x32xf32>
    %277 = arith.addf %275, %276 : vector<8x32xf32>
    %278 = math.tanh %277 : vector<8x32xf32>
    %279 = arith.mulf %274, %278 : vector<8x32xf32>
    %cst_49 = arith.constant dense<0.000000e+00> : vector<8x128xf32>
    %280 = tpu.matmul %279, %222, %cst_49 {dimension_numbers = #tpu.dot_dimension_numbers<[1], [0], [0], [1], [0, 0, 1, 1], [], []>} : vector<8x32xf32>, vector<32x128xf32>, vector<8x128xf32> -> vector<8x128xf32>
    %281 = arith.addf %280, %225 : vector<8x128xf32>
    %282 = vector.extract_strided_slice %281 {offsets = [0, 0], sizes = [8, 32], strides = [1, 1]} : vector<8x128xf32> to vector<8x32xf32>
    %283 = arith.negf %282 : vector<8x32xf32>
    %284 = math.exp %283 : vector<8x32xf32>
    %cst_50 = arith.constant 1.000000e+00 : f32
    %285 = vector.broadcast %cst_50 : f32 to vector<8x32xf32>
    %286 = arith.addf %285, %284 : vector<8x32xf32>
    %287 = arith.divf %285, %286 : vector<8x32xf32>
    %288 = vector.extract_strided_slice %281 {offsets = [0, 32], sizes = [8, 32], strides = [1, 1]} : vector<8x128xf32> to vector<8x32xf32>
    %289 = arith.negf %288 : vector<8x32xf32>
    %290 = math.exp %289 : vector<8x32xf32>
    %cst_51 = arith.constant 1.000000e+00 : f32
    %291 = vector.broadcast %cst_51 : f32 to vector<8x32xf32>
    %292 = arith.addf %291, %290 : vector<8x32xf32>
    %293 = arith.divf %291, %292 : vector<8x32xf32>
    %294 = vector.extract_strided_slice %281 {offsets = [0, 64], sizes = [8, 32], strides = [1, 1]} : vector<8x128xf32> to vector<8x32xf32>
    %295 = math.tanh %294 : vector<8x32xf32>
    %296 = vector.extract_strided_slice %281 {offsets = [0, 96], sizes = [8, 32], strides = [1, 1]} : vector<8x128xf32> to vector<8x32xf32>
    %297 = arith.negf %296 : vector<8x32xf32>
    %298 = math.exp %297 : vector<8x32xf32>
    %cst_52 = arith.constant 1.000000e+00 : f32
    %299 = vector.broadcast %cst_52 : f32 to vector<8x32xf32>
    %300 = arith.addf %299, %298 : vector<8x32xf32>
    %301 = arith.divf %299, %300 : vector<8x32xf32>
    %302 = arith.mulf %293, %277 : vector<8x32xf32>
    %303 = arith.mulf %287, %295 : vector<8x32xf32>
    %304 = arith.addf %302, %303 : vector<8x32xf32>
    %305 = math.tanh %304 : vector<8x32xf32>
    %306 = arith.mulf %301, %305 : vector<8x32xf32>
    %307 = tpu.concatenate %221, %252, %279, %306 in 0 : vector<8x32xf32>, vector<8x32xf32>, vector<8x32xf32>, vector<8x32xf32> -> vector<32x32xf32>
    %c0_53 = arith.constant 0 : index
    %c0_54 = arith.constant 0 : index
    %308 = vector.load %arg7[%c0_53, %c0_54] : memref<1x16xf32, #tpu.memory_space<vmem>>, vector<1x16xf32>
    %309 = vector.shape_cast %308 : vector<1x16xf32> to vector<1x16xf32>
    %310 = vector.broadcast %309 : vector<1x16xf32> to vector<32x16xf32>
    %c0_55 = arith.constant 0 : index
    %c0_56 = arith.constant 0 : index
    %311 = vector.load %arg6[%c0_55, %c0_56] : memref<32x16xf32, #tpu.memory_space<vmem>>, vector<32x16xf32>
    %cst_57 = arith.constant dense<0.000000e+00> : vector<32x16xf32>
    %312 = tpu.matmul %307, %311, %cst_57 {dimension_numbers = #tpu.dot_dimension_numbers<[1], [0], [0], [1], [0, 0, 1, 1], [], []>} : vector<32x32xf32>, vector<32x16xf32>, vector<32x16xf32> -> vector<32x16xf32>
    %313 = arith.addf %312, %310 : vector<32x16xf32>
    %c0_58 = arith.constant 0 : index
    %c0_59 = arith.constant 0 : index
    %314 = vector.load %arg8[%c0_58, %c0_59] : memref<32x16xf32, #tpu.memory_space<vmem>>, vector<32x16xf32>
    tpu.vector_store %arg8[%c0_58, %c0_59], %313 {strides = array<i32>} : memref<32x16xf32, #tpu.memory_space<vmem>>, vector<32x16xf32>,
    return
  }
}

</mosaic_0001>

<llo_original>
// kernel: tpu_custom_call.1
$region0: #{tpu_custom_call.1}
  #allocation0 [shape = 'u32[]', space=smem, size = 0x4, offset = 0x4, fixed_abs, tag = 'smem constant byte address 0x4 - core index']
  #allocation1 [shape = 'u32[144,128]{1,0:T(1,128)}', space=vmem, size = 0x12000, scoped, tag = 'internal scratch']
  %s0 = inlined_call_operand.vmem [shape: f32[64,16], index: 0, kind: input, shape index: {}]
  %s1 = inlined_call_operand.vmem [shape: f32[16,128], index: 1, kind: input, shape index: {}]
  %s2 = inlined_call_operand.vmem [shape: f32[32,128], index: 2, kind: input, shape index: {}]
  %s3 = inlined_call_operand.vmem [shape: f32[32,128], index: 3, kind: input, shape index: {}]
  %s4 = inlined_call_operand.vmem [shape: f32[1,128], index: 4, kind: input, shape index: {}]
  %s5 = inlined_call_operand.vmem [shape: f32[1,128], index: 5, kind: input, shape index: {}]
  %s6 = inlined_call_operand.vmem [shape: f32[32,16], index: 6, kind: input, shape index: {}]
  %s7 = inlined_call_operand.vmem [shape: f32[1,16], index: 7, kind: input, shape index: {}]
  %s8 = inlined_call_operand.vmem [shape: f32[32,16], index: 8, kind: output, shape index: {}]
  %s9 = sld [smem:[#allocation0]]
  $region42: #{tpu_custom_call.1} parent=0
    _
  %s11 = ssub.s32 1, %s9
  %s12 = scalar_select 0, %s11, %s9
  // Predicated region
  $region2: #{tpu_custom_call.1} parent=0 // pred_check
    _
  $region3: #{tpu_custom_call.1} parent=0 // pred_check_branch
    %14 = sbr.rel (0) target = $region5
  $region4: #{tpu_custom_call.1} parent=0 // pred_region
    _
  $region5: #{tpu_custom_call.1} parent=0 // pred_fallthru
    _
  // Predicated region
  $region6: #{tpu_custom_call.1} parent=0 // pred_check
    _
  $region7: #{tpu_custom_call.1} parent=0 // pred_check_branch
    %16 = sbr.rel (0) target = $region9
  $region8: #{tpu_custom_call.1} parent=0 // pred_region
    _
  $region9: #{tpu_custom_call.1} parent=0 // pred_fallthru
    _
  // Predicated region
  $region10: #{tpu_custom_call.1} parent=0 // pred_check
    _
  $region11: #{tpu_custom_call.1} parent=0 // pred_check_branch
    %18 = sbr.rel (0) target = $region13
  $region12: #{tpu_custom_call.1} parent=0 // pred_region
    _
  $region13: #{tpu_custom_call.1} parent=0 // pred_fallthru
    _
  // Predicated region
  $region14: #{tpu_custom_call.1} parent=0 // pred_check
    _
  $region15: #{tpu_custom_call.1} parent=0 // pred_check_branch
    %20 = sbr.rel (0) target = $region17
  $region16: #{tpu_custom_call.1} parent=0 // pred_region
    _
  $region17: #{tpu_custom_call.1} parent=0 // pred_fallthru
    _
  // Predicated region
  $region18: #{tpu_custom_call.1} parent=0 // pred_check
    _
  $region19: #{tpu_custom_call.1} parent=0 // pred_check_branch
    %22 = sbr.rel (0) target = $region21
  $region20: #{tpu_custom_call.1} parent=0 // pred_region
    _
  $region21: #{tpu_custom_call.1} parent=0 // pred_fallthru
    _
  // Predicated region
  $region22: #{tpu_custom_call.1} parent=0 // pred_check
    _
  $region23: #{tpu_custom_call.1} parent=0 // pred_check_branch
    %24 = sbr.rel (0) target = $region25
  $region24: #{tpu_custom_call.1} parent=0 // pred_region
    _
  $region25: #{tpu_custom_call.1} parent=0 // pred_fallthru
    _
  // Predicated region
  $region26: #{tpu_custom_call.1} parent=0 // pred_check
    _
  $region27: #{tpu_custom_call.1} parent=0 // pred_check_branch
    %26 = sbr.rel (0) target = $region29
  $region28: #{tpu_custom_call.1} parent=0 // pred_region
    _
  $region29: #{tpu_custom_call.1} parent=0 // pred_fallthru
    _
  // Predicated region
  $region30: #{tpu_custom_call.1} parent=0 // pred_check
    _
  $region31: #{tpu_custom_call.1} parent=0 // pred_check_branch
    %28 = sbr.rel (0) target = $region33
  $region32: #{tpu_custom_call.1} parent=0 // pred_region
    _
  $region33: #{tpu_custom_call.1} parent=0 // pred_fallthru
    _
  %v29 = vld [vmem:[%s4] sm:$0x1]
  %v31 = vlaneseq
  %v32 = vshrl.u32 %v31, 7
  %v33 = vsub.s32 0, %v32
  %v34 = vrot.slane %v29, %v33
  %v36 = vld [vmem:[%s0] sm:$0xff]
  %v37 = vld [vmem:[%s0 + $0x8] sm:$0xff]
  %v38 = vld [vmem:[%s0 + $0x10] sm:$0xff]
  %v39 = vld [vmem:[%s0 + $0x18] sm:$0xff]
  %v40 = vld [vmem:[%s0 + $0x20] sm:$0xff]
  %v41 = vld [vmem:[%s0 + $0x28] sm:$0xff]
  %v42 = vld [vmem:[%s0 + $0x30] sm:$0xff]
  %v43 = vld [vmem:[%s0 + $0x38] sm:$0xff]
  %v44 = vld [vmem:[%s1] sm:$0xff]
  %v45 = vld [vmem:[%s1 + $0x8] sm:$0xff]
  %vm46 = vcmask 130048
  %v48 = vsel %vm46, %v36, 0
  %v51 = vsel %vm46, %v37, 0
  %v54 = vsel %vm46, %v38, 0
  %v57 = vsel %vm46, %v39, 0
  %v60 = vsel %vm46, %v40, 0
  %v63 = vsel %vm46, %v41, 0
  %v66 = vsel %vm46, %v42, 0
  %v69 = vsel %vm46, %v43, 0
  %71 = vmatprep.subr.mxu0 0.0
  %72 = vmatpush1.msra.mxu0 0.0
  %73 = vmatprep.subr.mxu0 0.0
  %74 = vmatpush1.msra.mxu0 0.0
  %75 = vmatprep.subr.mxu0 0.0
  %76 = vmatpush1.msra.mxu0 0.0
  %77 = vmatprep.subr.mxu0 0.0
  %78 = vmatpush1.msra.mxu0 0.0
  %79 = vmatprep.subr.mxu0 0.0
  %80 = vmatpush1.msra.mxu0 0.0
  %81 = vmatprep.subr.mxu0 0.0
  %82 = vmatpush1.msra.mxu0 0.0
  %83 = vmatprep.subr.mxu0 0.0
  %84 = vmatpush1.msra.mxu0 0.0
  %85 = vmatprep.subr.mxu0 0.0
  %86 = vmatpush1.msra.mxu0 0.0
  %87 = vmatprep.subr.mxu0 0.0
  %88 = vmatpush1.msra.mxu0 0.0
  %89 = vmatprep.subr.mxu0 0.0
  %90 = vmatpush1.msra.mxu0 0.0
  %91 = vmatprep.subr.mxu0 0.0
  %92 = vmatpush1.msra.mxu0 0.0
  %93 = vmatprep.subr.mxu0 0.0
  %94 = vmatpush1.msra.mxu0 0.0
  %95 = vmatprep.subr.mxu0 0.0
  %96 = vmatpush1.msra.mxu0 0.0
  %97 = vmatprep.subr.mxu0 0.0
  %98 = vmatpush1.msra.mxu0 0.0
  %99 = vmatprep.subr.mxu0 0.0
  %100 = vmatpush1.msra.mxu0 %v45
  %101 = vmatprep.subr.mxu0 0.0
  %102 = vmatpush1.msra.mxu0 %v44
  %103 = vmatprep.subr.mxu0 0.0
  %104 = vmatpush2.msra.mxu0 0.0
  %105 = vmatprep.subr.mxu0 0.0
  %106 = vmatpush2.msra.mxu0 0.0
  %107 = vmatprep.subr.mxu0 0.0
  %108 = vmatpush2.msra.mxu0 0.0
  %109 = vmatprep.subr.mxu0 0.0
  %110 = vmatpush2.msra.mxu0 0.0
  %111 = vmatprep.subr.mxu0 0.0
  %112 = vmatpush2.msra.mxu0 0.0
  %113 = vmatprep.subr.mxu0 0.0
  %114 = vmatpush2.msra.mxu0 0.0
  %115 = vmatprep.subr.mxu0 0.0
  %116 = vmatpush2.msra.mxu0 0.0
  %117 = vmatprep.subr.mxu0 0.0
  %118 = vmatpush2.msra.mxu0 0.0
  %119 = vmatprep.subr.mxu0 0.0
  %120 = vmatpush2.msra.mxu0 0.0
  %121 = vmatprep.subr.mxu0 0.0
  %122 = vmatpush2.msra.mxu0 0.0
  %123 = vmatprep.subr.mxu0 0.0
  %124 = vmatpush2.msra.mxu0 0.0
  %125 = vmatprep.subr.mxu0 0.0
  %126 = vmatpush2.msra.mxu0 0.0
  %127 = vmatprep.subr.mxu0 0.0
  %128 = vmatpush2.msra.mxu0 0.0
  %129 = vmatprep.subr.mxu0 0.0
  %130 = vmatpush2.msra.mxu0 0.0
  %131 = vmatprep.subr.mxu0 0.0
  %132 = vmatpush2.msra.mxu0 0.0
  %133 = vmatprep.subr.mxu0 0.0
  %134 = vmatpush2.msra.mxu0 0.0
  %135 = vmatprep.mubr.f32.mxu0 0.0
  %136 = vmatmul.mubr.f32.gmra.mxu0 %v48
  %v137 = vpop.f32.mrf.mxu0
  %v138 = vadd.f32 %v34, %v137
  %v139 = vpop.f32.mrf.mxu0
  %140 = vmatprep.mubr.f32.mxu0 0.0
  %141 = vmatmul.mubr.f32.gmra.mxu0 %v51
  %v142 = vpop.f32.mrf.mxu0
  %v143 = vadd.f32 %v34, %v142
  %v144 = vpop.f32.mrf.mxu0
  %145 = vmatprep.mubr.f32.mxu0 0.0
  %146 = vmatmul.mubr.f32.gmra.mxu0 %v54
  %v147 = vpop.f32.mrf.mxu0
  %v148 = vadd.f32 %v34, %v147
  %v149 = vpop.f32.mrf.mxu0
  %150 = vmatprep.mubr.f32.mxu0 0.0
  %151 = vmatmul.mubr.f32.gmra.mxu0 %v57
  %v152 = vpop.f32.mrf.mxu0
  %v153 = vadd.f32 %v34, %v152
  %v154 = vpop.f32.mrf.mxu0
  %155 = vmatprep.mubr.f32.mxu0 0.0
  %156 = vmatmul.mubr.f32.gmra.mxu0 %v60
  %v157 = vpop.f32.mrf.mxu0
  %v158 = vadd.f32 %v34, %v157
  %v159 = vpop.f32.mrf.mxu0
  %160 = vmatprep.mubr.f32.mxu0 0.0
  %161 = vmatmul.mubr.f32.gmra.mxu0 %v63
  %v162 = vpop.f32.mrf.mxu0
  %v163 = vadd.f32 %v34, %v162
  %v164 = vpop.f32.mrf.mxu0
  %165 = vmatprep.mubr.f32.mxu0 0.0
  %166 = vmatmul.mubr.f32.gmra.mxu0 %v66
  %v167 = vpop.f32.mrf.mxu0
  %v168 = vadd.f32 %v34, %v167
  %v169 = vpop.f32.mrf.mxu0
  %170 = vmatprep.mubr.f32.mxu0 0.0
  %171 = vmatmul.mubr.f32.gmra.mxu0 %v69
  %v172 = vpop.f32.mrf.mxu0
  %v173 = vadd.f32 %v34, %v172
  %v174 = vpop.f32.mrf.mxu0
  %175 = vdwg.mxu0
  %v176 = vld [vmem:[%s2] sm:$0xff]
  %v177 = vld [vmem:[%s2 + $0x8] sm:$0xff]
  %v178 = vld [vmem:[%s2 + $0x10] sm:$0xff]
  %v179 = vld [vmem:[%s2 + $0x18] sm:$0xff]
  %v180 = vxor.u32 %v138, 2147483648
  %v181 = vmul.f32 %v180, 1.442695
  %v182 = vpow.pop %v181
  %v183 = vadd.f32 %v182, 1.0
  %v184 = vrcp.pop %v183
  %v185 = vmul.f32 1.0, %v184
  %v186 = vtanh.pop %v138
  %188 = vrot.lane.b32.xlu0 %v186, 64
  %v189 = vpop.permute.xlu0 %188
  %v191 = vmul.f32 %v185, %v189
  %v192 = vtanh.pop %v191
  %194 = vrot.lane.b32.xlu0 %v192, 96
  %v195 = vpop.permute.xlu0 %194
  %v197 = vmul.f32 %v185, %v195
  %199 = vrot.lane.b32.xlu0 %v197, 32
  %v200 = vpop.permute.xlu0 %199
  %vm201 = vcmask 261120
  %v202 = vsel %vm201, %v200, 0
  %204 = vmatprep.subr.mxu0 0.0
  %205 = vmatpush1.msra.mxu0 0.0
  %206 = vmatprep.subr.mxu0 0.0
  %207 = vmatpush1.msra.mxu0 0.0
  %208 = vmatprep.subr.mxu0 0.0
  %209 = vmatpush1.msra.mxu0 0.0
  %210 = vmatprep.subr.mxu0 0.0
  %211 = vmatpush1.msra.mxu0 0.0
  %212 = vmatprep.subr.mxu0 0.0
  %213 = vmatpush1.msra.mxu0 0.0
  %214 = vmatprep.subr.mxu0 0.0
  %215 = vmatpush1.msra.mxu0 0.0
  %216 = vmatprep.subr.mxu0 0.0
  %217 = vmatpush1.msra.mxu0 0.0
  %218 = vmatprep.subr.mxu0 0.0
  %219 = vmatpush1.msra.mxu0 0.0
  %220 = vmatprep.subr.mxu0 0.0
  %221 = vmatpush1.msra.mxu0 0.0
  %222 = vmatprep.subr.mxu0 0.0
  %223 = vmatpush1.msra.mxu0 0.0
  %224 = vmatprep.subr.mxu0 0.0
  %225 = vmatpush1.msra.mxu0 0.0
  %226 = vmatprep.subr.mxu0 0.0
  %227 = vmatpush1.msra.mxu0 0.0
  %228 = vmatprep.subr.mxu0 0.0
  %229 = vmatpush1.msra.mxu0 %v179
  %230 = vmatprep.subr.mxu0 0.0
  %231 = vmatpush1.msra.mxu0 %v178
  %232 = vmatprep.subr.mxu0 0.0
  %233 = vmatpush1.msra.mxu0 %v177
  %234 = vmatprep.subr.mxu0 0.0
  %235 = vmatpush1.msra.mxu0 %v176
  %236 = vmatprep.subr.mxu0 0.0
  %237 = vmatpush2.msra.mxu0 0.0
  %238 = vmatprep.subr.mxu0 0.0
  %239 = vmatpush2.msra.mxu0 0.0
  %240 = vmatprep.subr.mxu0 0.0
  %241 = vmatpush2.msra.mxu0 0.0
  %242 = vmatprep.subr.mxu0 0.0
  %243 = vmatpush2.msra.mxu0 0.0
  %244 = vmatprep.subr.mxu0 0.0
  %245 = vmatpush2.msra.mxu0 0.0
  %246 = vmatprep.subr.mxu0 0.0
  %247 = vmatpush2.msra.mxu0 0.0
  %248 = vmatprep.subr.mxu0 0.0
  %249 = vmatpush2.msra.mxu0 0.0
  %250 = vmatprep.subr.mxu0 0.0
  %251 = vmatpush2.msra.mxu0 0.0
  %252 = vmatprep.subr.mxu0 0.0
  %253 = vmatpush2.msra.mxu0 0.0
  %254 = vmatprep.subr.mxu0 0.0
  %255 = vmatpush2.msra.mxu0 0.0
  %256 = vmatprep.subr.mxu0 0.0
  %257 = vmatpush2.msra.mxu0 0.0
  %258 = vmatprep.subr.mxu0 0.0
  %259 = vmatpush2.msra.mxu0 0.0
  %260 = vmatprep.subr.mxu0 0.0
  %261 = vmatpush2.msra.mxu0 0.0
  %262 = vmatprep.subr.mxu0 0.0
  %263 = vmatpush2.msra.mxu0 0.0
  %264 = vmatprep.subr.mxu0 0.0
  %265 = vmatpush2.msra.mxu0 0.0
  %266 = vmatprep.subr.mxu0 0.0
  %267 = vmatpush2.msra.mxu0 0.0
  %268 = vmatprep.mubr.f32.mxu0 0.0
  %269 = vmatmul.mubr.f32.gmra.mxu0 %v202
  %v270 = vpop.f32.mrf.mxu0
  %v271 = vadd.f32 0.0, %v270
  %v272 = vpop.f32.mrf.mxu0
  %273 = vdwg.mxu0
  %v274 = vadd.f32 %v143, %v271
  %v275 = vxor.u32 %v274, 2147483648
  %v276 = vmul.f32 %v275, 1.442695
  %v277 = vpow.pop %v276
  %v278 = vadd.f32 %v277, 1.0
  %v279 = vrcp.pop %v278
  %v280 = vmul.f32 1.0, %v279
  %v281 = vtanh.pop %v274
  %283 = vrot.lane.b32.xlu0 %v191, 32
  %v284 = vpop.permute.xlu0 %283
  %v286 = vmul.f32 %v280, %v284
  %288 = vrot.lane.b32.xlu0 %v281, 64
  %v289 = vpop.permute.xlu0 %288
  %v291 = vmul.f32 %v280, %v289
  %293 = vrot.lane.b32.xlu0 %v291, 32
  %v294 = vpop.permute.xlu0 %293
  %v296 = vadd.f32 %v286, %v294
  %v297 = vtanh.pop %v296
  %299 = vrot.lane.b32.xlu0 %v297, 64
  %v300 = vpop.permute.xlu0 %299
  %v302 = vmul.f32 %v280, %v300
  %304 = vrot.lane.b32.xlu0 %v302, 32
  %v305 = vpop.permute.xlu0 %304
  %v306 = vsel %vm201, %v305, 0
  %308 = vmatprep.subr.mxu0 0.0
  %309 = vmatpush1.msra.mxu0 0.0
  %310 = vmatprep.subr.mxu0 0.0
  %311 = vmatpush1.msra.mxu0 0.0
  %312 = vmatprep.subr.mxu0 0.0
  %313 = vmatpush1.msra.mxu0 0.0
  %314 = vmatprep.subr.mxu0 0.0
  %315 = vmatpush1.msra.mxu0 0.0
  %316 = vmatprep.subr.mxu0 0.0
  %317 = vmatpush1.msra.mxu0 0.0
  %318 = vmatprep.subr.mxu0 0.0
  %319 = vmatpush1.msra.mxu0 0.0
  %320 = vmatprep.subr.mxu0 0.0
  %321 = vmatpush1.msra.mxu0 0.0
  %322 = vmatprep.subr.mxu0 0.0
  %323 = vmatpush1.msra.mxu0 0.0
  %324 = vmatprep.subr.mxu0 0.0
  %325 = vmatpush1.msra.mxu0 0.0
  %326 = vmatprep.subr.mxu0 0.0
  %327 = vmatpush1.msra.mxu0 0.0
  %328 = vmatprep.subr.mxu0 0.0
  %329 = vmatpush1.msra.mxu0 0.0
  %330 = vmatprep.subr.mxu0 0.0
  %331 = vmatpush1.msra.mxu0 0.0
  %332 = vmatprep.subr.mxu0 0.0
  %333 = vmatpush1.msra.mxu0 %v179
  %334 = vmatprep.subr.mxu0 0.0
  %335 = vmatpush1.msra.mxu0 %v178
  %336 = vmatprep.subr.mxu0 0.0
  %337 = vmatpush1.msra.mxu0 %v177
  %338 = vmatprep.subr.mxu0 0.0
  %339 = vmatpush1.msra.mxu0 %v176
  %340 = vmatprep.subr.mxu0 0.0
  %341 = vmatpush2.msra.mxu0 0.0
  %342 = vmatprep.subr.mxu0 0.0
  %343 = vmatpush2.msra.mxu0 0.0
  %344 = vmatprep.subr.mxu0 0.0
  %345 = vmatpush2.msra.mxu0 0.0
  %346 = vmatprep.subr.mxu0 0.0
  %347 = vmatpush2.msra.mxu0 0.0
  %348 = vmatprep.subr.mxu0 0.0
  %349 = vmatpush2.msra.mxu0 0.0
  %350 = vmatprep.subr.mxu0 0.0
  %351 = vmatpush2.msra.mxu0 0.0
  %352 = vmatprep.subr.mxu0 0.0
  %353 = vmatpush2.msra.mxu0 0.0
  %354 = vmatprep.subr.mxu0 0.0
  %355 = vmatpush2.msra.mxu0 0.0
  %356 = vmatprep.subr.mxu0 0.0
  %357 = vmatpush2.msra.mxu0 0.0
  %358 = vmatprep.subr.mxu0 0.0
  %359 = vmatpush2.msra.mxu0 0.0
  %360 = vmatprep.subr.mxu0 0.0
  %361 = vmatpush2.msra.mxu0 0.0
  %362 = vmatprep.subr.mxu0 0.0
  %363 = vmatpush2.msra.mxu0 0.0
  %364 = vmatprep.subr.mxu0 0.0
  %365 = vmatpush2.msra.mxu0 0.0
  %366 = vmatprep.subr.mxu0 0.0
  %367 = vmatpush2.msra.mxu0 0.0
  %368 = vmatprep.subr.mxu0 0.0
  %369 = vmatpush2.msra.mxu0 0.0
  %370 = vmatprep.subr.mxu0 0.0
  %371 = vmatpush2.msra.mxu0 0.0
  %372 = vmatprep.mubr.f32.mxu0 0.0
  %373 = vmatmul.mubr.f32.gmra.mxu0 %v306
  %v374 = vpop.f32.mrf.mxu0
  %v375 = vadd.f32 0.0, %v374
  %v376 = vpop.f32.mrf.mxu0
  %377 = vdwg.mxu0
  %v378 = vadd.f32 %v148, %v375
  %v379 = vxor.u32 %v378, 2147483648
  %v380 = vmul.f32 %v379, 1.442695
  %v381 = vpow.pop %v380
  %v382 = vadd.f32 %v381, 1.0
  %v383 = vrcp.pop %v382
  %v384 = vmul.f32 1.0, %v383
  %v385 = vtanh.pop %v378
  %v386 = vmul.f32 %v384, %v296
  %388 = vrot.lane.b32.xlu0 %v385, 64
  %v389 = vpop.permute.xlu0 %388
  %v391 = vmul.f32 %v384, %v389
  %393 = vrot.lane.b32.xlu0 %v391, 32
  %v394 = vpop.permute.xlu0 %393
  %v396 = vadd.f32 %v386, %v394
  %v397 = vtanh.pop %v396
  %399 = vrot.lane.b32.xlu0 %v397, 64
  %v400 = vpop.permute.xlu0 %399
  %v402 = vmul.f32 %v384, %v400
  %404 = vrot.lane.b32.xlu0 %v402, 32
  %v405 = vpop.permute.xlu0 %404
  %v406 = vsel %vm201, %v405, 0
  %408 = vmatprep.subr.mxu0 0.0
  %409 = vmatpush1.msra.mxu0 0.0
  %410 = vmatprep.subr.mxu0 0.0
  %411 = vmatpush1.msra.mxu0 0.0
  %412 = vmatprep.subr.mxu0 0.0
  %413 = vmatpush1.msra.mxu0 0.0
  %414 = vmatprep.subr.mxu0 0.0
  %415 = vmatpush1.msra.mxu0 0.0
  %416 = vmatprep.subr.mxu0 0.0
  %417 = vmatpush1.msra.mxu0 0.0
  %418 = vmatprep.subr.mxu0 0.0
  %419 = vmatpush1.msra.mxu0 0.0
  %420 = vmatprep.subr.mxu0 0.0
  %421 = vmatpush1.msra.mxu0 0.0
  %422 = vmatprep.subr.mxu0 0.0
  %423 = vmatpush1.msra.mxu0 0.0
  %424 = vmatprep.subr.mxu0 0.0
  %425 = vmatpush1.msra.mxu0 0.0
  %426 = vmatprep.subr.mxu0 0.0
  %427 = vmatpush1.msra.mxu0 0.0
  %428 = vmatprep.subr.mxu0 0.0
  %429 = vmatpush1.msra.mxu0 0.0
  %430 = vmatprep.subr.mxu0 0.0
  %431 = vmatpush1.msra.mxu0 0.0
  %432 = vmatprep.subr.mxu0 0.0
  %433 = vmatpush1.msra.mxu0 %v179
  %434 = vmatprep.subr.mxu0 0.0
  %435 = vmatpush1.msra.mxu0 %v178
  %436 = vmatprep.subr.mxu0 0.0
  %437 = vmatpush1.msra.mxu0 %v177
  %438 = vmatprep.subr.mxu0 0.0
  %439 = vmatpush1.msra.mxu0 %v176
  %440 = vmatprep.subr.mxu0 0.0
  %441 = vmatpush2.msra.mxu0 0.0
  %442 = vmatprep.subr.mxu0 0.0
  %443 = vmatpush2.msra.mxu0 0.0
  %444 = vmatprep.subr.mxu0 0.0
  %445 = vmatpush2.msra.mxu0 0.0
  %446 = vmatprep.subr.mxu0 0.0
  %447 = vmatpush2.msra.mxu0 0.0
  %448 = vmatprep.subr.mxu0 0.0
  %449 = vmatpush2.msra.mxu0 0.0
  %450 = vmatprep.subr.mxu0 0.0
  %451 = vmatpush2.msra.mxu0 0.0
  %452 = vmatprep.subr.mxu0 0.0
  %453 = vmatpush2.msra.mxu0 0.0
  %454 = vmatprep.subr.mxu0 0.0
  %455 = vmatpush2.msra.mxu0 0.0
  %456 = vmatprep.subr.mxu0 0.0
  %457 = vmatpush2.msra.mxu0 0.0
  %458 = vmatprep.subr.mxu0 0.0
  %459 = vmatpush2.msra.mxu0 0.0
  %460 = vmatprep.subr.mxu0 0.0
  %461 = vmatpush2.msra.mxu0 0.0
  %462 = vmatprep.subr.mxu0 0.0
  %463 = vmatpush2.msra.mxu0 0.0
  %464 = vmatprep.subr.mxu0 0.0
  %465 = vmatpush2.msra.mxu0 0.0
  %466 = vmatprep.subr.mxu0 0.0
  %467 = vmatpush2.msra.mxu0 0.0
  %468 = vmatprep.subr.mxu0 0.0
  %469 = vmatpush2.msra.mxu0 0.0
  %470 = vmatprep.subr.mxu0 0.0
  %471 = vmatpush2.msra.mxu0 0.0
  %472 = vmatprep.mubr.f32.mxu0 0.0
  %473 = vmatmul.mubr.f32.gmra.mxu0 %v406
  %v474 = vpop.f32.mrf.mxu0
  %v475 = vadd.f32 0.0, %v474
  %v476 = vpop.f32.mrf.mxu0
  %477 = vdwg.mxu0
  %v478 = vadd.f32 %v153, %v475
  %v479 = vxor.u32 %v478, 2147483648
  %v480 = vmul.f32 %v479, 1.442695
  %v481 = vpow.pop %v480
  %v482 = vadd.f32 %v481, 1.0
  %v483 = vrcp.pop %v482
  %v484 = vmul.f32 1.0, %v483
  %v485 = vtanh.pop %v478
  %v486 = vmul.f32 %v484, %v396
  %488 = vrot.lane.b32.xlu0 %v485, 64
  %v489 = vpop.permute.xlu0 %488
  %v491 = vmul.f32 %v484, %v489
  %493 = vrot.lane.b32.xlu0 %v491, 32
  %v494 = vpop.permute.xlu0 %493
  %v496 = vadd.f32 %v486, %v494
  %v497 = vtanh.pop %v496
  %499 = vrot.lane.b32.xlu0 %v497, 64
  %v500 = vpop.permute.xlu0 %499
  %v502 = vmul.f32 %v484, %v500
  %504 = vrot.lane.b32.xlu0 %v502, 32
  %v505 = vpop.permute.xlu0 %504
  %v506 = vsel %vm201, %v505, 0
  %508 = vmatprep.subr.mxu0 0.0
  %509 = vmatpush1.msra.mxu0 0.0
  %510 = vmatprep.subr.mxu0 0.0
  %511 = vmatpush1.msra.mxu0 0.0
  %512 = vmatprep.subr.mxu0 0.0
  %513 = vmatpush1.msra.mxu0 0.0
  %514 = vmatprep.subr.mxu0 0.0
  %515 = vmatpush1.msra.mxu0 0.0
  %516 = vmatprep.subr.mxu0 0.0
  %517 = vmatpush1.msra.mxu0 0.0
  %518 = vmatprep.subr.mxu0 0.0
  %519 = vmatpush1.msra.mxu0 0.0
  %520 = vmatprep.subr.mxu0 0.0
  %521 = vmatpush1.msra.mxu0 0.0
  %522 = vmatprep.subr.mxu0 0.0
  %523 = vmatpush1.msra.mxu0 0.0
  %524 = vmatprep.subr.mxu0 0.0
  %525 = vmatpush1.msra.mxu0 0.0
  %526 = vmatprep.subr.mxu0 0.0
  %527 = vmatpush1.msra.mxu0 0.0
  %528 = vmatprep.subr.mxu0 0.0
  %529 = vmatpush1.msra.mxu0 0.0
  %530 = vmatprep.subr.mxu0 0.0
  %531 = vmatpush1.msra.mxu0 0.0
  %532 = vmatprep.subr.mxu0 0.0
  %533 = vmatpush1.msra.mxu0 %v179
  %534 = vmatprep.subr.mxu0 0.0
  %535 = vmatpush1.msra.mxu0 %v178
  %536 = vmatprep.subr.mxu0 0.0
  %537 = vmatpush1.msra.mxu0 %v177
  %538 = vmatprep.subr.mxu0 0.0
  %539 = vmatpush1.msra.mxu0 %v176
  %540 = vmatprep.subr.mxu0 0.0
  %541 = vmatpush2.msra.mxu0 0.0
  %542 = vmatprep.subr.mxu0 0.0
  %543 = vmatpush2.msra.mxu0 0.0
  %544 = vmatprep.subr.mxu0 0.0
  %545 = vmatpush2.msra.mxu0 0.0
  %546 = vmatprep.subr.mxu0 0.0
  %547 = vmatpush2.msra.mxu0 0.0
  %548 = vmatprep.subr.mxu0 0.0
  %549 = vmatpush2.msra.mxu0 0.0
  %550 = vmatprep.subr.mxu0 0.0
  %551 = vmatpush2.msra.mxu0 0.0
  %552 = vmatprep.subr.mxu0 0.0
  %553 = vmatpush2.msra.mxu0 0.0
  %554 = vmatprep.subr.mxu0 0.0
  %555 = vmatpush2.msra.mxu0 0.0
  %556 = vmatprep.subr.mxu0 0.0
  %557 = vmatpush2.msra.mxu0 0.0
  %558 = vmatprep.subr.mxu0 0.0
  %559 = vmatpush2.msra.mxu0 0.0
  %560 = vmatprep.subr.mxu0 0.0
  %561 = vmatpush2.msra.mxu0 0.0
  %562 = vmatprep.subr.mxu0 0.0
  %563 = vmatpush2.msra.mxu0 0.0
  %564 = vmatprep.subr.mxu0 0.0
  %565 = vmatpush2.msra.mxu0 0.0
  %566 = vmatprep.subr.mxu0 0.0
  %567 = vmatpush2.msra.mxu0 0.0
  %568 = vmatprep.subr.mxu0 0.0
  %569 = vmatpush2.msra.mxu0 0.0
  %570 = vmatprep.subr.mxu0 0.0
  %571 = vmatpush2.msra.mxu0 0.0
  %572 = vmatprep.mubr.f32.mxu0 0.0
  %573 = vmatmul.mubr.f32.gmra.mxu0 %v506
  %v574 = vpop.f32.mrf.mxu0
  %v575 = vadd.f32 0.0, %v574
  %v576 = vpop.f32.mrf.mxu0
  %577 = vdwg.mxu0
  %v578 = vadd.f32 %v158, %v575
  %v579 = vxor.u32 %v578, 2147483648
  %v580 = vmul.f32 %v579, 1.442695
  %v581 = vpow.pop %v580
  %v582 = vadd.f32 %v581, 1.0
  %v583 = vrcp.pop %v582
  %v584 = vmul.f32 1.0, %v583
  %v585 = vtanh.pop %v578
  %v586 = vmul.f32 %v584, %v496
  %588 = vrot.lane.b32.xlu0 %v585, 64
  %v589 = vpop.permute.xlu0 %588
  %v591 = vmul.f32 %v584, %v589
  %593 = vrot.lane.b32.xlu0 %v591, 32
  %v594 = vpop.permute.xlu0 %593
  %v596 = vadd.f32 %v586, %v594
  %v597 = vtanh.pop %v596
  %599 = vrot.lane.b32.xlu0 %v597, 64
  %v600 = vpop.permute.xlu0 %599
  %v602 = vmul.f32 %v584, %v600
  %604 = vrot.lane.b32.xlu0 %v602, 32
  %v605 = vpop.permute.xlu0 %604
  %v606 = vsel %vm201, %v605, 0
  %608 = vmatprep.subr.mxu0 0.0
  %609 = vmatpush1.msra.mxu0 0.0
  %610 = vmatprep.subr.mxu0 0.0
  %611 = vmatpush1.msra.mxu0 0.0
  %612 = vmatprep.subr.mxu0 0.0
  %613 = vmatpush1.msra.mxu0 0.0
  %614 = vmatprep.subr.mxu0 0.0
  %615 = vmatpush1.msra.mxu0 0.0
  %616 = vmatprep.subr.mxu0 0.0
  %617 = vmatpush1.msra.mxu0 0.0
  %618 = vmatprep.subr.mxu0 0.0
  %619 = vmatpush1.msra.mxu0 0.0
  %620 = vmatprep.subr.mxu0 0.0
  %621 = vmatpush1.msra.mxu0 0.0
  %622 = vmatprep.subr.mxu0 0.0
  %623 = vmatpush1.msra.mxu0 0.0
  %624 = vmatprep.subr.mxu0 0.0
  %625 = vmatpush1.msra.mxu0 0.0
  %626 = vmatprep.subr.mxu0 0.0
  %627 = vmatpush1.msra.mxu0 0.0
  %628 = vmatprep.subr.mxu0 0.0
  %629 = vmatpush1.msra.mxu0 0.0
  %630 = vmatprep.subr.mxu0 0.0
  %631 = vmatpush1.msra.mxu0 0.0
  %632 = vmatprep.subr.mxu0 0.0
  %633 = vmatpush1.msra.mxu0 %v179
  %634 = vmatprep.subr.mxu0 0.0
  %635 = vmatpush1.msra.mxu0 %v178
  %636 = vmatprep.subr.mxu0 0.0
  %637 = vmatpush1.msra.mxu0 %v177
  %638 = vmatprep.subr.mxu0 0.0
  %639 = vmatpush1.msra.mxu0 %v176
  %640 = vmatprep.subr.mxu0 0.0
  %641 = vmatpush2.msra.mxu0 0.0
  %642 = vmatprep.subr.mxu0 0.0
  %643 = vmatpush2.msra.mxu0 0.0
  %644 = vmatprep.subr.mxu0 0.0
  %645 = vmatpush2.msra.mxu0 0.0
  %646 = vmatprep.subr.mxu0 0.0
  %647 = vmatpush2.msra.mxu0 0.0
  %648 = vmatprep.subr.mxu0 0.0
  %649 = vmatpush2.msra.mxu0 0.0
  %650 = vmatprep.subr.mxu0 0.0
  %651 = vmatpush2.msra.mxu0 0.0
  %652 = vmatprep.subr.mxu0 0.0
  %653 = vmatpush2.msra.mxu0 0.0
  %654 = vmatprep.subr.mxu0 0.0
  %655 = vmatpush2.msra.mxu0 0.0
  %656 = vmatprep.subr.mxu0 0.0
  %657 = vmatpush2.msra.mxu0 0.0
  %658 = vmatprep.subr.mxu0 0.0
  %659 = vmatpush2.msra.mxu0 0.0
  %660 = vmatprep.subr.mxu0 0.0
  %661 = vmatpush2.msra.mxu0 0.0
  %662 = vmatprep.subr.mxu0 0.0
  %663 = vmatpush2.msra.mxu0 0.0
  %664 = vmatprep.subr.mxu0 0.0
  %665 = vmatpush2.msra.mxu0 0.0
  %666 = vmatprep.subr.mxu0 0.0
  %667 = vmatpush2.msra.mxu0 0.0
  %668 = vmatprep.subr.mxu0 0.0
  %669 = vmatpush2.msra.mxu0 0.0
  %670 = vmatprep.subr.mxu0 0.0
  %671 = vmatpush2.msra.mxu0 0.0
  %672 = vmatprep.mubr.f32.mxu0 0.0
  %673 = vmatmul.mubr.f32.gmra.mxu0 %v606
  %v674 = vpop.f32.mrf.mxu0
  %v675 = vadd.f32 0.0, %v674
  %v676 = vpop.f32.mrf.mxu0
  %677 = vdwg.mxu0
  %v678 = vadd.f32 %v163, %v675
  %v679 = vxor.u32 %v678, 2147483648
  %v680 = vmul.f32 %v679, 1.442695
  %v681 = vpow.pop %v680
  %v682 = vadd.f32 %v681, 1.0
  %v683 = vrcp.pop %v682
  %v684 = vmul.f32 1.0, %v683
  %v685 = vtanh.pop %v678
  %v686 = vmul.f32 %v684, %v596
  %688 = vrot.lane.b32.xlu0 %v685, 64
  %v689 = vpop.permute.xlu0 %688
  %v691 = vmul.f32 %v684, %v689
  %693 = vrot.lane.b32.xlu0 %v691, 32
  %v694 = vpop.permute.xlu0 %693
  %v696 = vadd.f32 %v686, %v694
  %v697 = vtanh.pop %v696
  %699 = vrot.lane.b32.xlu0 %v697, 64
  %v700 = vpop.permute.xlu0 %699
  %v702 = vmul.f32 %v684, %v700
  %704 = vrot.lane.b32.xlu0 %v702, 32
  %v705 = vpop.permute.xlu0 %704
  %v706 = vsel %vm201, %v705, 0
  %708 = vmatprep.subr.mxu0 0.0
  %709 = vmatpush1.msra.mxu0 0.0
  %710 = vmatprep.subr.mxu0 0.0
  %711 = vmatpush1.msra.mxu0 0.0
  %712 = vmatprep.subr.mxu0 0.0
  %713 = vmatpush1.msra.mxu0 0.0
  %714 = vmatprep.subr.mxu0 0.0
  %715 = vmatpush1.msra.mxu0 0.0
  %716 = vmatprep.subr.mxu0 0.0
  %717 = vmatpush1.msra.mxu0 0.0
  %718 = vmatprep.subr.mxu0 0.0
  %719 = vmatpush1.msra.mxu0 0.0
  %720 = vmatprep.subr.mxu0 0.0
  %721 = vmatpush1.msra.mxu0 0.0
  %722 = vmatprep.subr.mxu0 0.0
  %723 = vmatpush1.msra.mxu0 0.0
  %724 = vmatprep.subr.mxu0 0.0
  %725 = vmatpush1.msra.mxu0 0.0
  %726 = vmatprep.subr.mxu0 0.0
  %727 = vmatpush1.msra.mxu0 0.0
  %728 = vmatprep.subr.mxu0 0.0
  %729 = vmatpush1.msra.mxu0 0.0
  %730 = vmatprep.subr.mxu0 0.0
  %731 = vmatpush1.msra.mxu0 0.0
  %732 = vmatprep.subr.mxu0 0.0
  %733 = vmatpush1.msra.mxu0 %v179
  %734 = vmatprep.subr.mxu0 0.0
  %735 = vmatpush1.msra.mxu0 %v178
  %736 = vmatprep.subr.mxu0 0.0
  %737 = vmatpush1.msra.mxu0 %v177
  %738 = vmatprep.subr.mxu0 0.0
  %739 = vmatpush1.msra.mxu0 %v176
  %740 = vmatprep.subr.mxu0 0.0
  %741 = vmatpush2.msra.mxu0 0.0
  %742 = vmatprep.subr.mxu0 0.0
  %743 = vmatpush2.msra.mxu0 0.0
  %744 = vmatprep.subr.mxu0 0.0
  %745 = vmatpush2.msra.mxu0 0.0
  %746 = vmatprep.subr.mxu0 0.0
  %747 = vmatpush2.msra.mxu0 0.0
  %748 = vmatprep.subr.mxu0 0.0
  %749 = vmatpush2.msra.mxu0 0.0
  %750 = vmatprep.subr.mxu0 0.0
  %751 = vmatpush2.msra.mxu0 0.0
  %752 = vmatprep.subr.mxu0 0.0
  %753 = vmatpush2.msra.mxu0 0.0
  %754 = vmatprep.subr.mxu0 0.0
  %755 = vmatpush2.msra.mxu0 0.0
  %756 = vmatprep.subr.mxu0 0.0
  %757 = vmatpush2.msra.mxu0 0.0
  %758 = vmatprep.subr.mxu0 0.0
  %759 = vmatpush2.msra.mxu0 0.0
  %760 = vmatprep.subr.mxu0 0.0
  %761 = vmatpush2.msra.mxu0 0.0
  %762 = vmatprep.subr.mxu0 0.0
  %763 = vmatpush2.msra.mxu0 0.0
  %764 = vmatprep.subr.mxu0 0.0
  %765 = vmatpush2.msra.mxu0 0.0
  %766 = vmatprep.subr.mxu0 0.0
  %767 = vmatpush2.msra.mxu0 0.0
  %768 = vmatprep.subr.mxu0 0.0
  %769 = vmatpush2.msra.mxu0 0.0
  %770 = vmatprep.subr.mxu0 0.0
  %771 = vmatpush2.msra.mxu0 0.0
  %772 = vmatprep.mubr.f32.mxu0 0.0
  %773 = vmatmul.mubr.f32.gmra.mxu0 %v706
  %v774 = vpop.f32.mrf.mxu0
  %v775 = vadd.f32 0.0, %v774
  %v776 = vpop.f32.mrf.mxu0
  %777 = vdwg.mxu0
  %v778 = vadd.f32 %v168, %v775
  %v779 = vxor.u32 %v778, 2147483648
  %v780 = vmul.f32 %v779, 1.442695
  %v781 = vpow.pop %v780
  %v782 = vadd.f32 %v781, 1.0
  %v783 = vrcp.pop %v782
  %v784 = vmul.f32 1.0, %v783
  %v785 = vtanh.pop %v778
  %v786 = vmul.f32 %v784, %v696
  %788 = vrot.lane.b32.xlu0 %v785, 64
  %v789 = vpop.permute.xlu0 %788
  %v791 = vmul.f32 %v784, %v789
  %793 = vrot.lane.b32.xlu0 %v791, 32
  %v794 = vpop.permute.xlu0 %793
  %v796 = vadd.f32 %v786, %v794
  %v797 = vtanh.pop %v796
  %799 = vrot.lane.b32.xlu0 %v797, 64
  %v800 = vpop.permute.xlu0 %799
  %v802 = vmul.f32 %v784, %v800
  %804 = vrot.lane.b32.xlu0 %v802, 32
  %v805 = vpop.permute.xlu0 %804
  %v806 = vsel %vm201, %v805, 0
  %808 = vmatprep.subr.mxu0 0.0
  %809 = vmatpush1.msra.mxu0 0.0
  %810 = vmatprep.subr.mxu0 0.0
  %811 = vmatpush1.msra.mxu0 0.0
  %812 = vmatprep.subr.mxu0 0.0
  %813 = vmatpush1.msra.mxu0 0.0
  %814 = vmatprep.subr.mxu0 0.0
  %815 = vmatpush1.msra.mxu0 0.0
  %816 = vmatprep.subr.mxu0 0.0
  %817 = vmatpush1.msra.mxu0 0.0
  %818 = vmatprep.subr.mxu0 0.0
  %819 = vmatpush1.msra.mxu0 0.0
  %820 = vmatprep.subr.mxu0 0.0
  %821 = vmatpush1.msra.mxu0 0.0
  %822 = vmatprep.subr.mxu0 0.0
  %823 = vmatpush1.msra.mxu0 0.0
  %824 = vmatprep.subr.mxu0 0.0
  %825 = vmatpush1.msra.mxu0 0.0
  %826 = vmatprep.subr.mxu0 0.0
  %827 = vmatpush1.msra.mxu0 0.0
  %828 = vmatprep.subr.mxu0 0.0
  %829 = vmatpush1.msra.mxu0 0.0
  %830 = vmatprep.subr.mxu0 0.0
  %831 = vmatpush1.msra.mxu0 0.0
  %832 = vmatprep.subr.mxu0 0.0
  %833 = vmatpush1.msra.mxu0 %v179
  %834 = vmatprep.subr.mxu0 0.0
  %835 = vmatpush1.msra.mxu0 %v178
  %836 = vmatprep.subr.mxu0 0.0
  %837 = vmatpush1.msra.mxu0 %v177
  %838 = vmatprep.subr.mxu0 0.0
  %839 = vmatpush1.msra.mxu0 %v176
  %840 = vmatprep.subr.mxu0 0.0
  %841 = vmatpush2.msra.mxu0 0.0
  %842 = vmatprep.subr.mxu0 0.0
  %843 = vmatpush2.msra.mxu0 0.0
  %844 = vmatprep.subr.mxu0 0.0
  %845 = vmatpush2.msra.mxu0 0.0
  %846 = vmatprep.subr.mxu0 0.0
  %847 = vmatpush2.msra.mxu0 0.0
  %848 = vmatprep.subr.mxu0 0.0
  %849 = vmatpush2.msra.mxu0 0.0
  %850 = vmatprep.subr.mxu0 0.0
  %851 = vmatpush2.msra.mxu0 0.0
  %852 = vmatprep.subr.mxu0 0.0
  %853 = vmatpush2.msra.mxu0 0.0
  %854 = vmatprep.subr.mxu0 0.0
  %855 = vmatpush2.msra.mxu0 0.0
  %856 = vmatprep.subr.mxu0 0.0
  %857 = vmatpush2.msra.mxu0 0.0
  %858 = vmatprep.subr.mxu0 0.0
  %859 = vmatpush2.msra.mxu0 0.0
  %860 = vmatprep.subr.mxu0 0.0
  %861 = vmatpush2.msra.mxu0 0.0
  %862 = vmatprep.subr.mxu0 0.0
  %863 = vmatpush2.msra.mxu0 0.0
  %864 = vmatprep.subr.mxu0 0.0
  %865 = vmatpush2.msra.mxu0 0.0
  %866 = vmatprep.subr.mxu0 0.0
  %867 = vmatpush2.msra.mxu0 0.0
  %868 = vmatprep.subr.mxu0 0.0
  %869 = vmatpush2.msra.mxu0 0.0
  %870 = vmatprep.subr.mxu0 0.0
  %871 = vmatpush2.msra.mxu0 0.0
  %872 = vmatprep.mubr.f32.mxu0 0.0
  %873 = vmatmul.mubr.f32.gmra.mxu0 %v806
  %v874 = vpop.f32.mrf.mxu0
  %v875 = vadd.f32 0.0, %v874
  %v876 = vpop.f32.mrf.mxu0
  %877 = vdwg.mxu0
  %v878 = vadd.f32 %v173, %v875
  %v879 = vxor.u32 %v878, 2147483648
  %v880 = vmul.f32 %v879, 1.442695
  %v881 = vpow.pop %v880
  %v882 = vadd.f32 %v881, 1.0
  %v883 = vrcp.pop %v882
  %v884 = vmul.f32 1.0, %v883
  %v885 = vtanh.pop %v878
  %v886 = vmul.f32 %v884, %v796
  %888 = vrot.lane.b32.xlu0 %v885, 64
  %v889 = vpop.permute.xlu0 %888
  %v891 = vmul.f32 %v884, %v889
  %893 = vrot.lane.b32.xlu0 %v891, 32
  %v894 = vpop.permute.xlu0 %893
  %v896 = vadd.f32 %v886, %v894
  %v897 = vtanh.pop %v896
  %899 = vrot.lane.b32.xlu0 %v897, 64
  %v900 = vpop.permute.xlu0 %899
  %v902 = vmul.f32 %v884, %v900
  %v903 = vld [vmem:[%s3] sm:$0xff]
  %v904 = vld [vmem:[%s3 + $0x8] sm:$0xff]
  %v905 = vld [vmem:[%s3 + $0x10] sm:$0xff]
  %v906 = vld [vmem:[%s3 + $0x18] sm:$0xff]
  %v907 = vld [vmem:[%s5] sm:$0x1]
  %v909 = vlaneseq
  %v910 = vshrl.u32 %v909, 7
  %v911 = vsub.s32 0, %v910
  %v912 = vrot.slane %v907, %v911
  %915 = vrot.lane.b32.xlu0 %v902, 32
  %v916 = vpop.permute.xlu0 %915
  %v917 = vsel %vm201, %v916, 0
  %919 = vmatprep.subr.mxu0 0.0
  %920 = vmatpush1.msra.mxu0 0.0
  %921 = vmatprep.subr.mxu0 0.0
  %922 = vmatpush1.msra.mxu0 0.0
  %923 = vmatprep.subr.mxu0 0.0
  %924 = vmatpush1.msra.mxu0 0.0
  %925 = vmatprep.subr.mxu0 0.0
  %926 = vmatpush1.msra.mxu0 0.0
  %927 = vmatprep.subr.mxu0 0.0
  %928 = vmatpush1.msra.mxu0 0.0
  %929 = vmatprep.subr.mxu0 0.0
  %930 = vmatpush1.msra.mxu0 0.0
  %931 = vmatprep.subr.mxu0 0.0
  %932 = vmatpush1.msra.mxu0 0.0
  %933 = vmatprep.subr.mxu0 0.0
  %934 = vmatpush1.msra.mxu0 0.0
  %935 = vmatprep.subr.mxu0 0.0
  %936 = vmatpush1.msra.mxu0 0.0
  %937 = vmatprep.subr.mxu0 0.0
  %938 = vmatpush1.msra.mxu0 0.0
  %939 = vmatprep.subr.mxu0 0.0
  %940 = vmatpush1.msra.mxu0 0.0
  %941 = vmatprep.subr.mxu0 0.0
  %942 = vmatpush1.msra.mxu0 0.0
  %943 = vmatprep.subr.mxu0 0.0
  %944 = vmatpush1.msra.mxu0 %v906
  %945 = vmatprep.subr.mxu0 0.0
  %946 = vmatpush1.msra.mxu0 %v905
  %947 = vmatprep.subr.mxu0 0.0
  %948 = vmatpush1.msra.mxu0 %v904
  %949 = vmatprep.subr.mxu0 0.0
  %950 = vmatpush1.msra.mxu0 %v903
  %951 = vmatprep.subr.mxu0 0.0
  %952 = vmatpush2.msra.mxu0 0.0
  %953 = vmatprep.subr.mxu0 0.0
  %954 = vmatpush2.msra.mxu0 0.0
  %955 = vmatprep.subr.mxu0 0.0
  %956 = vmatpush2.msra.mxu0 0.0
  %957 = vmatprep.subr.mxu0 0.0
  %958 = vmatpush2.msra.mxu0 0.0
  %959 = vmatprep.subr.mxu0 0.0
  %960 = vmatpush2.msra.mxu0 0.0
  %961 = vmatprep.subr.mxu0 0.0
  %962 = vmatpush2.msra.mxu0 0.0
  %963 = vmatprep.subr.mxu0 0.0
  %964 = vmatpush2.msra.mxu0 0.0
  %965 = vmatprep.subr.mxu0 0.0
  %966 = vmatpush2.msra.mxu0 0.0
  %967 = vmatprep.subr.mxu0 0.0
  %968 = vmatpush2.msra.mxu0 0.0
  %969 = vmatprep.subr.mxu0 0.0
  %970 = vmatpush2.msra.mxu0 0.0
  %971 = vmatprep.subr.mxu0 0.0
  %972 = vmatpush2.msra.mxu0 0.0
  %973 = vmatprep.subr.mxu0 0.0
  %974 = vmatpush2.msra.mxu0 0.0
  %975 = vmatprep.subr.mxu0 0.0
  %976 = vmatpush2.msra.mxu0 0.0
  %977 = vmatprep.subr.mxu0 0.0
  %978 = vmatpush2.msra.mxu0 0.0
  %979 = vmatprep.subr.mxu0 0.0
  %980 = vmatpush2.msra.mxu0 0.0
  %981 = vmatprep.subr.mxu0 0.0
  %982 = vmatpush2.msra.mxu0 0.0
  %983 = vmatprep.mubr.f32.mxu0 0.0
  %984 = vmatmul.mubr.f32.gmra.mxu0 %v917
  %v985 = vpop.f32.mrf.mxu0
  %v986 = vadd.f32 %v912, %v985
  %v987 = vpop.f32.mrf.mxu0
  %988 = vdwg.mxu0
  %v989 = vxor.u32 %v986, 2147483648
  %v990 = vmul.f32 %v989, 1.442695
  %v991 = vpow.pop %v990
  %v992 = vadd.f32 %v991, 1.0
  %v993 = vrcp.pop %v992
  %v994 = vmul.f32 1.0, %v993
  %v995 = vtanh.pop %v986
  %v996 = vmul.f32 %v994, %v896
  %998 = vrot.lane.b32.xlu0 %v995, 64
  %v999 = vpop.permute.xlu0 %998
  %v1001 = vmul.f32 %v994, %v999
  %1003 = vrot.lane.b32.xlu0 %v1001, 32
  %v1004 = vpop.permute.xlu0 %1003
  %v1006 = vadd.f32 %v996, %v1004
  %v1007 = vtanh.pop %v1006
  %1009 = vrot.lane.b32.xlu0 %v1007, 64
  %v1010 = vpop.permute.xlu0 %1009
  %v1012 = vmul.f32 %v994, %v1010
  %1014 = vrot.lane.b32.xlu0 %v1012, 32
  %v1015 = vpop.permute.xlu0 %1014
  %v1016 = vsel %vm201, %v1015, 0
  %1018 = vmatprep.subr.mxu0 0.0
  %1019 = vmatpush1.msra.mxu0 0.0
  %1020 = vmatprep.subr.mxu0 0.0
  %1021 = vmatpush1.msra.mxu0 0.0
  %1022 = vmatprep.subr.mxu0 0.0
  %1023 = vmatpush1.msra.mxu0 0.0
  %1024 = vmatprep.subr.mxu0 0.0
  %1025 = vmatpush1.msra.mxu0 0.0
  %1026 = vmatprep.subr.mxu0 0.0
  %1027 = vmatpush1.msra.mxu0 0.0
  %1028 = vmatprep.subr.mxu0 0.0
  %1029 = vmatpush1.msra.mxu0 0.0
  %1030 = vmatprep.subr.mxu0 0.0
  %1031 = vmatpush1.msra.mxu0 0.0
  %1032 = vmatprep.subr.mxu0 0.0
  %1033 = vmatpush1.msra.mxu0 0.0
  %1034 = vmatprep.subr.mxu0 0.0
  %1035 = vmatpush1.msra.mxu0 0.0
  %1036 = vmatprep.subr.mxu0 0.0
  %1037 = vmatpush1.msra.mxu0 0.0
  %1038 = vmatprep.subr.mxu0 0.0
  %1039 = vmatpush1.msra.mxu0 0.0
  %1040 = vmatprep.subr.mxu0 0.0
  %1041 = vmatpush1.msra.mxu0 0.0
  %1042 = vmatprep.subr.mxu0 0.0
  %1043 = vmatpush1.msra.mxu0 %v906
  %1044 = vmatprep.subr.mxu0 0.0
  %1045 = vmatpush1.msra.mxu0 %v905
  %1046 = vmatprep.subr.mxu0 0.0
  %1047 = vmatpush1.msra.mxu0 %v904
  %1048 = vmatprep.subr.mxu0 0.0
  %1049 = vmatpush1.msra.mxu0 %v903
  %1050 = vmatprep.subr.mxu0 0.0
  %1051 = vmatpush2.msra.mxu0 0.0
  %1052 = vmatprep.subr.mxu0 0.0
  %1053 = vmatpush2.msra.mxu0 0.0
  %1054 = vmatprep.subr.mxu0 0.0
  %1055 = vmatpush2.msra.mxu0 0.0
  %1056 = vmatprep.subr.mxu0 0.0
  %1057 = vmatpush2.msra.mxu0 0.0
  %1058 = vmatprep.subr.mxu0 0.0
  %1059 = vmatpush2.msra.mxu0 0.0
  %1060 = vmatprep.subr.mxu0 0.0
  %1061 = vmatpush2.msra.mxu0 0.0
  %1062 = vmatprep.subr.mxu0 0.0
  %1063 = vmatpush2.msra.mxu0 0.0
  %1064 = vmatprep.subr.mxu0 0.0
  %1065 = vmatpush2.msra.mxu0 0.0
  %1066 = vmatprep.subr.mxu0 0.0
  %1067 = vmatpush2.msra.mxu0 0.0
  %1068 = vmatprep.subr.mxu0 0.0
  %1069 = vmatpush2.msra.mxu0 0.0
  %1070 = vmatprep.subr.mxu0 0.0
  %1071 = vmatpush2.msra.mxu0 0.0
  %1072 = vmatprep.subr.mxu0 0.0
  %1073 = vmatpush2.msra.mxu0 0.0
  %1074 = vmatprep.subr.mxu0 0.0
  %1075 = vmatpush2.msra.mxu0 0.0
  %1076 = vmatprep.subr.mxu0 0.0
  %1077 = vmatpush2.msra.mxu0 0.0
  %1078 = vmatprep.subr.mxu0 0.0
  %1079 = vmatpush2.msra.mxu0 0.0
  %1080 = vmatprep.subr.mxu0 0.0
  %1081 = vmatpush2.msra.mxu0 0.0
  %1082 = vmatprep.mubr.f32.mxu0 0.0
  %1083 = vmatmul.mubr.f32.gmra.mxu0 %v1016
  %v1084 = vpop.f32.mrf.mxu0
  %v1085 = vadd.f32 %v912, %v1084
  %v1086 = vpop.f32.mrf.mxu0
  %1087 = vdwg.mxu0
  %v1088 = vxor.u32 %v1085, 2147483648
  %v1089 = vmul.f32 %v1088, 1.442695
  %v1090 = vpow.pop %v1089
  %v1091 = vadd.f32 %v1090, 1.0
  %v1092 = vrcp.pop %v1091
  %v1093 = vmul.f32 1.0, %v1092
  %v1094 = vtanh.pop %v1085
  %v1095 = vmul.f32 %v1093, %v1006
  %1097 = vrot.lane.b32.xlu0 %v1094, 64
  %v1098 = vpop.permute.xlu0 %1097
  %v1100 = vmul.f32 %v1093, %v1098
  %1102 = vrot.lane.b32.xlu0 %v1100, 32
  %v1103 = vpop.permute.xlu0 %1102
  %v1105 = vadd.f32 %v1095, %v1103
  %v1106 = vtanh.pop %v1105
  %1108 = vrot.lane.b32.xlu0 %v1106, 64
  %v1109 = vpop.permute.xlu0 %1108
  %v1111 = vmul.f32 %v1093, %v1109
  %1113 = vrot.lane.b32.xlu0 %v1111, 32
  %v1114 = vpop.permute.xlu0 %1113
  %v1115 = vsel %vm201, %v1114, 0
  %1117 = vmatprep.subr.mxu0 0.0
  %1118 = vmatpush1.msra.mxu0 0.0
  %1119 = vmatprep.subr.mxu0 0.0
  %1120 = vmatpush1.msra.mxu0 0.0
  %1121 = vmatprep.subr.mxu0 0.0
  %1122 = vmatpush1.msra.mxu0 0.0
  %1123 = vmatprep.subr.mxu0 0.0
  %1124 = vmatpush1.msra.mxu0 0.0
  %1125 = vmatprep.subr.mxu0 0.0
  %1126 = vmatpush1.msra.mxu0 0.0
  %1127 = vmatprep.subr.mxu0 0.0
  %1128 = vmatpush1.msra.mxu0 0.0
  %1129 = vmatprep.subr.mxu0 0.0
  %1130 = vmatpush1.msra.mxu0 0.0
  %1131 = vmatprep.subr.mxu0 0.0
  %1132 = vmatpush1.msra.mxu0 0.0
  %1133 = vmatprep.subr.mxu0 0.0
  %1134 = vmatpush1.msra.mxu0 0.0
  %1135 = vmatprep.subr.mxu0 0.0
  %1136 = vmatpush1.msra.mxu0 0.0
  %1137 = vmatprep.subr.mxu0 0.0
  %1138 = vmatpush1.msra.mxu0 0.0
  %1139 = vmatprep.subr.mxu0 0.0
  %1140 = vmatpush1.msra.mxu0 0.0
  %1141 = vmatprep.subr.mxu0 0.0
  %1142 = vmatpush1.msra.mxu0 %v906
  %1143 = vmatprep.subr.mxu0 0.0
  %1144 = vmatpush1.msra.mxu0 %v905
  %1145 = vmatprep.subr.mxu0 0.0
  %1146 = vmatpush1.msra.mxu0 %v904
  %1147 = vmatprep.subr.mxu0 0.0
  %1148 = vmatpush1.msra.mxu0 %v903
  %1149 = vmatprep.subr.mxu0 0.0
  %1150 = vmatpush2.msra.mxu0 0.0
  %1151 = vmatprep.subr.mxu0 0.0
  %1152 = vmatpush2.msra.mxu0 0.0
  %1153 = vmatprep.subr.mxu0 0.0
  %1154 = vmatpush2.msra.mxu0 0.0
  %1155 = vmatprep.subr.mxu0 0.0
  %1156 = vmatpush2.msra.mxu0 0.0
  %1157 = vmatprep.subr.mxu0 0.0
  %1158 = vmatpush2.msra.mxu0 0.0
  %1159 = vmatprep.subr.mxu0 0.0
  %1160 = vmatpush2.msra.mxu0 0.0
  %1161 = vmatprep.subr.mxu0 0.0
  %1162 = vmatpush2.msra.mxu0 0.0
  %1163 = vmatprep.subr.mxu0 0.0
  %1164 = vmatpush2.msra.mxu0 0.0
  %1165 = vmatprep.subr.mxu0 0.0
  %1166 = vmatpush2.msra.mxu0 0.0
  %1167 = vmatprep.subr.mxu0 0.0
  %1168 = vmatpush2.msra.mxu0 0.0
  %1169 = vmatprep.subr.mxu0 0.0
  %1170 = vmatpush2.msra.mxu0 0.0
  %1171 = vmatprep.subr.mxu0 0.0
  %1172 = vmatpush2.msra.mxu0 0.0
  %1173 = vmatprep.subr.mxu0 0.0
  %1174 = vmatpush2.msra.mxu0 0.0
  %1175 = vmatprep.subr.mxu0 0.0
  %1176 = vmatpush2.msra.mxu0 0.0
  %1177 = vmatprep.subr.mxu0 0.0
  %1178 = vmatpush2.msra.mxu0 0.0
  %1179 = vmatprep.subr.mxu0 0.0
  %1180 = vmatpush2.msra.mxu0 0.0
  %1181 = vmatprep.mubr.f32.mxu0 0.0
  %1182 = vmatmul.mubr.f32.gmra.mxu0 %v1115
  %v1183 = vpop.f32.mrf.mxu0
  %v1184 = vadd.f32 %v912, %v1183
  %v1185 = vpop.f32.mrf.mxu0
  %1186 = vdwg.mxu0
  %v1187 = vxor.u32 %v1184, 2147483648
  %v1188 = vmul.f32 %v1187, 1.442695
  %v1189 = vpow.pop %v1188
  %v1190 = vadd.f32 %v1189, 1.0
  %v1191 = vrcp.pop %v1190
  %v1192 = vmul.f32 1.0, %v1191
  %v1193 = vtanh.pop %v1184
  %v1194 = vmul.f32 %v1192, %v1105
  %1196 = vrot.lane.b32.xlu0 %v1193, 64
  %v1197 = vpop.permute.xlu0 %1196
  %v1199 = vmul.f32 %v1192, %v1197
  %1201 = vrot.lane.b32.xlu0 %v1199, 32
  %v1202 = vpop.permute.xlu0 %1201
  %v1204 = vadd.f32 %v1194, %v1202
  %v1205 = vtanh.pop %v1204
  %1207 = vrot.lane.b32.xlu0 %v1205, 64
  %v1208 = vpop.permute.xlu0 %1207
  %v1210 = vmul.f32 %v1192, %v1208
  %v1211 = vld [vmem:[%s7] sm:$0x1]
  %v1213 = vlaneseq
  %v1214 = vshrl.u32 %v1213, 7
  %v1215 = vsub.s32 0, %v1214
  %v1216 = vrot.slane %v1211, %v1215
  %v1218 = vld [vmem:[%s6] sm:$0xff]
  %v1219 = vld [vmem:[%s6 + $0x8] sm:$0xff]
  %v1220 = vld [vmem:[%s6 + $0x10] sm:$0xff]
  %v1221 = vld [vmem:[%s6 + $0x18] sm:$0xff]
  %1223 = vrot.lane.b32.xlu0 %v1210, 32
  %v1224 = vpop.permute.xlu0 %1223
  %v1225 = vsel %vm201, %v1224, 0
  %1227 = vmatprep.subr.mxu0 0.0
  %1228 = vmatpush1.msra.mxu0 0.0
  %1229 = vmatprep.subr.mxu0 0.0
  %1230 = vmatpush1.msra.mxu0 0.0
  %1231 = vmatprep.subr.mxu0 0.0
  %1232 = vmatpush1.msra.mxu0 0.0
  %1233 = vmatprep.subr.mxu0 0.0
  %1234 = vmatpush1.msra.mxu0 0.0
  %1235 = vmatprep.subr.mxu0 0.0
  %1236 = vmatpush1.msra.mxu0 0.0
  %1237 = vmatprep.subr.mxu0 0.0
  %1238 = vmatpush1.msra.mxu0 0.0
  %1239 = vmatprep.subr.mxu0 0.0
  %1240 = vmatpush1.msra.mxu0 0.0
  %1241 = vmatprep.subr.mxu0 0.0
  %1242 = vmatpush1.msra.mxu0 0.0
  %1243 = vmatprep.subr.mxu0 0.0
  %1244 = vmatpush1.msra.mxu0 0.0
  %1245 = vmatprep.subr.mxu0 0.0
  %1246 = vmatpush1.msra.mxu0 0.0
  %1247 = vmatprep.subr.mxu0 0.0
  %1248 = vmatpush1.msra.mxu0 0.0
  %1249 = vmatprep.subr.mxu0 0.0
  %1250 = vmatpush1.msra.mxu0 0.0
  %1251 = vmatprep.subr.mxu0 0.0
  %1252 = vmatpush1.msra.mxu0 %v1221
  %1253 = vmatprep.subr.mxu0 0.0
  %1254 = vmatpush1.msra.mxu0 %v1220
  %1255 = vmatprep.subr.mxu0 0.0
  %1256 = vmatpush1.msra.mxu0 %v1219
  %1257 = vmatprep.subr.mxu0 0.0
  %1258 = vmatpush1.msra.mxu0 %v1218
  %1259 = vmatprep.subr.mxu0 0.0
  %1260 = vmatpush2.msra.mxu0 0.0
  %1261 = vmatprep.subr.mxu0 0.0
  %1262 = vmatpush2.msra.mxu0 0.0
  %1263 = vmatprep.subr.mxu0 0.0
  %1264 = vmatpush2.msra.mxu0 0.0
  %1265 = vmatprep.subr.mxu0 0.0
  %1266 = vmatpush2.msra.mxu0 0.0
  %1267 = vmatprep.subr.mxu0 0.0
  %1268 = vmatpush2.msra.mxu0 0.0
  %1269 = vmatprep.subr.mxu0 0.0
  %1270 = vmatpush2.msra.mxu0 0.0
  %1271 = vmatprep.subr.mxu0 0.0
  %1272 = vmatpush2.msra.mxu0 0.0
  %1273 = vmatprep.subr.mxu0 0.0
  %1274 = vmatpush2.msra.mxu0 0.0
  %1275 = vmatprep.subr.mxu0 0.0
  %1276 = vmatpush2.msra.mxu0 0.0
  %1277 = vmatprep.subr.mxu0 0.0
  %1278 = vmatpush2.msra.mxu0 0.0
  %1279 = vmatprep.subr.mxu0 0.0
  %1280 = vmatpush2.msra.mxu0 0.0
  %1281 = vmatprep.subr.mxu0 0.0
  %1282 = vmatpush2.msra.mxu0 0.0
  %1283 = vmatprep.subr.mxu0 0.0
  %1284 = vmatpush2.msra.mxu0 0.0
  %1285 = vmatprep.subr.mxu0 0.0
  %1286 = vmatpush2.msra.mxu0 0.0
  %1287 = vmatprep.subr.mxu0 0.0
  %1288 = vmatpush2.msra.mxu0 0.0
  %1289 = vmatprep.subr.mxu0 0.0
  %1290 = vmatpush2.msra.mxu0 0.0
  %1291 = vmatprep.mubr.f32.mxu0 0.0
  %1292 = vmatmul.mubr.f32.gmra.mxu0 %v917
  %v1293 = vpop.f32.mrf.mxu0
  %v1294 = vadd.f32 %v1216, %v1293
  %v1295 = vpop.f32.mrf.mxu0
  %1296 = vmatprep.mubr.f32.mxu0 0.0
  %1297 = vmatmul.mubr.f32.gmra.mxu0 %v1016
  %v1298 = vpop.f32.mrf.mxu0
  %v1299 = vadd.f32 %v1216, %v1298
  %v1300 = vpop.f32.mrf.mxu0
  %1301 = vmatprep.mubr.f32.mxu0 0.0
  %1302 = vmatmul.mubr.f32.gmra.mxu0 %v1115
  %v1303 = vpop.f32.mrf.mxu0
  %v1304 = vadd.f32 %v1216, %v1303
  %v1305 = vpop.f32.mrf.mxu0
  %1306 = vmatprep.mubr.f32.mxu0 0.0
  %1307 = vmatmul.mubr.f32.gmra.mxu0 %v1225
  %v1308 = vpop.f32.mrf.mxu0
  %v1309 = vadd.f32 %v1216, %v1308
  %v1310 = vpop.f32.mrf.mxu0
  %1311 = vdwg.mxu0
  %1312 = vst.msk [vmem:[%s8] sm:$0xff] %vm46, %v1294
  %1313 = vst.msk [vmem:[%s8 + $0x8] sm:$0xff] %vm46, %v1299
  %1314 = vst.msk [vmem:[%s8 + $0x10] sm:$0xff] %vm46, %v1304
  %1315 = vst.msk [vmem:[%s8 + $0x18] sm:$0xff] %vm46, %v1309
  // Predicated region
  $region34: #{tpu_custom_call.1} parent=0 // pred_check
    _
  $region35: #{tpu_custom_call.1} parent=0 // pred_check_branch
    %1317 = sbr.rel (0) target = $region37
  $region36: #{tpu_custom_call.1} parent=0 // pred_region
    _
  $region37: #{tpu_custom_call.1} parent=0 // pred_fallthru
    _
  // Predicated region
  $region38: #{tpu_custom_call.1} parent=0 // pred_check
    _
  $region39: #{tpu_custom_call.1} parent=0 // pred_check_branch
    %1319 = sbr.rel (0) target = $region41
  $region40: #{tpu_custom_call.1} parent=0 // pred_region
    _
  $region41: #{tpu_custom_call.1} parent=0 // pred_fallthru
    _

</llo_original>
